<compile_context>
chip_gen: v7x
topology: tpu7x:2x2x1
jax: 0.10.0
libtpu: 0.0.40
codegen_flags: <defaults>
</compile_context>

<pallas_src>
import functools

import jax
import jax.numpy as jnp
import numpy as np
from jax.experimental import pallas as pl
from jax.experimental.pallas import tpu as pltpu

D_MODEL = 32
N_HEAD = 4
D_HEAD = D_MODEL // N_HEAD
D_FF = 64
LN_EPS = 1e-5  # PyTorch nn.LayerNorm default

# Rows of the packed (8, 128) bias/LayerNorm slab.  NOTE: assumes 3*D_MODEL <= 128.
_ROW_BQKV, _ROW_BO, _ROW_B1, _ROW_B2 = 0, 1, 2, 3
_ROW_LN1G, _ROW_LN1B, _ROW_LN2G, _ROW_LN2B = 4, 5, 6, 7


def _layer_norm(x, gamma, beta, eps=LN_EPS):
    mu = jnp.mean(x, axis=-1, keepdims=True)
    var = jnp.mean(jnp.square(x - mu), axis=-1, keepdims=True)
    return (x - mu) * jax.lax.rsqrt(var + eps) * gamma + beta


def _encoder_layer_kernel(x_ref, mask_ref, wqkv_ref, wo_ref, w1_ref, w2_ref,
                          bias_ref, *out_refs, bblk, seq_len, return_attention):
    """One grid step == `bblk` batch elements folded into the sublane axis."""
    if return_attention:
        out_ref, attn_ref = out_refs
    else:
        (out_ref,) = out_refs
        attn_ref = None

    D = D_MODEL
    dh = D_HEAD
    L = seq_len
    R = bblk * L

    x = x_ref[...]                                   # (R, D)
    # Additive mask: 0 = keep, -1e9 = masked (assumes |scores| << 1e9).
    mask_add = mask_ref[...].reshape(bblk, L, L)     # free split of the major dim

    # ---- Fused Q/K/V projection: single (R, D) @ (D, 3D) MXU call.
    # The 1/sqrt(d_head) score scale is already folded into the Q columns.
    qkv = jnp.dot(x, wqkv_ref[...], preferred_element_type=jnp.float32)
    qkv = qkv + bias_ref[_ROW_BQKV:_ROW_BQKV + 1, 0:3 * D]
    qkv3 = qkv.reshape(bblk, L, 3 * D)               # free split of the major dim

    wo = wo_ref[...]                                 # (D, D)

    # Residual + output-projection bias; per-head Wo contributions accumulate here
    # (no ctx VMEM scratch, no masked sub-stores, no write->read round trip).
    attn_out = x + bias_ref[_ROW_BO:_ROW_BO + 1, 0:D]

    attn_heads = []
    for h in range(N_HEAD):
        qh = qkv3[:, :, h * dh:(h + 1) * dh]                     # (bblk, L, dh)
        kh = qkv3[:, :, D + h * dh:D + (h + 1) * dh]
        vh = qkv3[:, :, 2 * D + h * dh:2 * D + (h + 1) * dh]

        s = jnp.einsum("bqd,bkd->bqk", qh, kh,
                       preferred_element_type=jnp.float32) + mask_add
        s = s - jnp.max(s, axis=-1, keepdims=True)               # stable softmax
        p = jnp.exp(s)
        attn = p / jnp.sum(p, axis=-1, keepdims=True)            # exact (no approx recip)

        if attn_ref is not None:
            attn_heads.append(attn)

        ctx_h = jnp.einsum("bqk,bkd->bqd", attn, vh,
                           preferred_element_type=jnp.float32)
        # Per-head output projection: ctx_h @ Wo[h*dh:(h+1)*dh, :], accumulated.
        attn_out = attn_out + jnp.dot(ctx_h.reshape(R, dh),
                                      wo[h * dh:(h + 1) * dh, :],
                                      preferred_element_type=jnp.float32)

    if attn_ref is not None:
        # Single lane-dense store of all heads: (bblk, L, N_HEAD*L).
        attn_ref[...] = jnp.concatenate(attn_heads, axis=-1)

    # dropout is identity (eval mode)
    x1 = _layer_norm(attn_out,
                     bias_ref[_ROW_LN1G:_ROW_LN1G + 1, 0:D],
                     bias_ref[_ROW_LN1B:_ROW_LN1B + 1, 0:D])

    # ---- Feed-forward network ----
    h1 = jnp.dot(x1, w1_ref[...], preferred_element_type=jnp.float32)
    h1 = jnp.maximum(h1 + bias_ref[_ROW_B1:_ROW_B1 + 1, 0:D_FF], 0.0)
    h2 = jnp.dot(h1, w2_ref[...], preferred_element_type=jnp.float32)
    h2 = h2 + bias_ref[_ROW_B2:_ROW_B2 + 1, 0:D]
    out = _layer_norm(h2 + x1,
                      bias_ref[_ROW_LN2G:_ROW_LN2G + 1, 0:D],
                      bias_ref[_ROW_LN2B:_ROW_LN2B + 1, 0:D])

    out_ref[...] = out.astype(out_ref.dtype)


def _choose_bblk(B, L):
    """Divisor-aware batch-block size.

    Targets ~2K rows per grid step (amortizes the ~0.35us per-step overhead),
    while preferring >=2 grid steps for v7x's two TensorCores whenever each
    step still carries >=512 rows.  Only divisors of B are considered, and the
    (8,128) constraint (R % 8 == 0 or R == B*L) is respected.
    """
    cap = max(1, 2048 // max(L, 1))
    divs = [d for d in range(1, B + 1)
            if B % d == 0 and (d == B or (d * L) % 8 == 0)]
    small = [d for d in divs if d <= cap]
    if not small:
        return B
    bblk = max(small)
    split = [d for d in small if B // d >= 2 and d * L >= 512]
    if split:
        bblk = max(split)
    return bblk


def init_params(rng):
    """Deterministic synthetic parameters (PyTorch-style: W (in,out), b (1,out))."""
    ks = jax.random.split(rng, 12)

    def lin(kw, kb, din, dout):
        w = jax.random.normal(kw, (din, dout), jnp.float32) / np.sqrt(din)
        b = jax.random.normal(kb, (1, dout), jnp.float32) * 0.01
        return w, b

    wq, bq = lin(ks[0], ks[1], D_MODEL, D_MODEL)
    wk, bk = lin(ks[2], ks[3], D_MODEL, D_MODEL)
    wv, bv = lin(ks[4], ks[5], D_MODEL, D_MODEL)
    wo, bo = lin(ks[6], ks[7], D_MODEL, D_MODEL)
    w1, b1 = lin(ks[8], ks[9], D_MODEL, D_FF)
    w2, b2 = lin(ks[10], ks[11], D_FF, D_MODEL)
    ln1_g = jnp.ones((1, D_MODEL), jnp.float32)
    ln1_b = jnp.zeros((1, D_MODEL), jnp.float32)
    ln2_g = jnp.ones((1, D_MODEL), jnp.float32)
    ln2_b = jnp.zeros((1, D_MODEL), jnp.float32)
    return (wq, bq, wk, bk, wv, bv, wo, bo, ln1_g, ln1_b,
            w1, b1, w2, b2, ln2_g, ln2_b)


def pack_params(raw_params):
    """Pack 16 small tensors into 4 weight mats + one (8,128) bias/LN slab."""
    (wq, bq, wk, bk, wv, bv, wo, bo, ln1_g, ln1_b,
     w1, b1, w2, b2, ln2_g, ln2_b) = raw_params
    assert 3 * D_MODEL <= 128 and D_FF <= 128, "packed bias slab assumes small dims"
    scale = jnp.float32(1.0 / np.sqrt(D_HEAD))
    wqkv = jnp.concatenate([wq * scale, wk, wv], axis=1)      # (D, 3D), scale folded
    bias = jnp.zeros((8, 128), jnp.float32)
    bias = bias.at[_ROW_BQKV, :3 * D_MODEL].set(
        jnp.concatenate([bq * scale, bk, bv], axis=1)[0])
    bias = bias.at[_ROW_BO, :D_MODEL].set(bo[0])
    bias = bias.at[_ROW_B1, :D_FF].set(b1[0])
    bias = bias.at[_ROW_B2, :D_MODEL].set(b2[0])
    bias = bias.at[_ROW_LN1G, :D_MODEL].set(ln1_g[0])
    bias = bias.at[_ROW_LN1B, :D_MODEL].set(ln1_b[0])
    bias = bias.at[_ROW_LN2G, :D_MODEL].set(ln2_g[0])
    bias = bias.at[_ROW_LN2B, :D_MODEL].set(ln2_b[0])
    return wqkv, wo, w1, w2, bias


@functools.partial(jax.jit, static_argnames=("return_attention",))
def _self_attn_forward(x, attention_mask, wqkv, wo, w1, w2, bias, *,
                       return_attention=True):
    B, L, D = x.shape
    assert D == D_MODEL
    BBLK = _choose_bblk(B, L)
    NB = B // BBLK
    R = BBLK * L

    x2 = x.reshape(B * L, D)                                        # lane-dense slab
    # Additive mask precomputed on the host, flattened to a plain 2-D slab.
    mask_add = ((attention_mask.astype(jnp.float32) - 1.0) * 1e9).reshape(B * L, L)

    in_specs = [
        pl.BlockSpec((R, D), lambda i: (i, 0)),           # x  (batch block)
        pl.BlockSpec((R, L), lambda i: (i, 0)),           # additive mask (flat)
        pl.BlockSpec((D, 3 * D), lambda i: (0, 0)),       # wqkv (fused, scaled)
        pl.BlockSpec((D, D), lambda i: (0, 0)),           # wo
        pl.BlockSpec((D, D_FF), lambda i: (0, 0)),        # w1
        pl.BlockSpec((D_FF, D), lambda i: (0, 0)),        # w2
        pl.BlockSpec((8, 128), lambda i: (0, 0)),         # packed bias/LN slab
    ]
    out_shapes = [jax.ShapeDtypeStruct((B * L, D), jnp.float32)]
    out_specs = [pl.BlockSpec((R, D), lambda i: (i, 0))]
    if return_attention:
        # Lane-dense packed attention maps: attn2[b, q, h*L + k].
        out_shapes.append(jax.ShapeDtypeStruct((B, L, N_HEAD * L), jnp.float32))
        out_specs.append(pl.BlockSpec((BBLK, L, N_HEAD * L), lambda i: (i, 0, 0)))

    kernel = functools.partial(_encoder_layer_kernel, bblk=BBLK, seq_len=L,
                               return_attention=return_attention)

    outs = pl.pallas_call(
        kernel,
        out_shape=tuple(out_shapes),
        grid_spec=pltpu.PrefetchScalarGridSpec(
            num_scalar_prefetch=0,
            grid=(NB,),
            in_specs=in_specs,
            out_specs=tuple(out_specs),
        ),
        compiler_params=pltpu.CompilerParams(
            dimension_semantics=("parallel",)),
    )(x2, mask_add, wqkv, wo, w1, w2, bias)

    enc_out = outs[0].reshape(B, L, D)
    if return_attention:
        attn = outs[1].reshape(B, L, N_HEAD, L).transpose(0, 2, 1, 3)  # (B,H,L,L)
        return enc_out, attn
    return enc_out


def layer_forward(query, key, val, attention_mask, packed_params, *,
                  return_attention=True):
    """Forward of `Layer` (self-attention path, as used by the PLAN encoder)."""
    if (key is not query) or (val is not query):
        # TODO(synk): cross-attention (key/val != query) and structure-aware
        # (key_structure / val_structure) paths of the original model are not
        # implemented; the transformer encoder only uses the self-attention /
        # None-structure path.
        raise NotImplementedError(
            "Only the self-attention path (query is key is val) is implemented.")
    return _self_attn_forward(query, attention_mask, *packed_params,
                              return_attention=return_attention)


def layer_forward_ref(query, key, val, attention_mask, raw_params):
    """Pure-JAX reference matching the PyTorch forward semantics (eval mode)."""
    (wq, bq, wk, bk, wv, bv, wo, bo, ln1_g, ln1_b,
     w1, b1, w2, b2, ln2_g, ln2_b) = raw_params
    B, Lq, D = query.shape

    def split_heads(x):
        return x.reshape(B, -1, N_HEAD, D_HEAD).transpose(0, 2, 1, 3)

    q = split_heads(query @ wq + bq)
    k = split_heads(key @ wk + bk)
    v = split_heads(val @ wv + bv)

    scores = jnp.einsum("bhqd,bhkd->bhqk", q, k) / np.sqrt(D_HEAD)
    scores = jnp.where(attention_mask[:, None, :, :] > 0, scores, -1e9)
    attn = jax.nn.softmax(scores, axis=-1)
    ctx = jnp.einsum("bhqk,bhkd->bhqd", attn, v)
    ctx = ctx.transpose(0, 2, 1, 3).reshape(B, Lq, D)

    def ln(x, g, b):
        mu = jnp.mean(x, -1, keepdims=True)
        var = jnp.mean((x - mu) ** 2, -1, keepdims=True)
        return (x - mu) * jax.lax.rsqrt(var + LN_EPS) * g + b

    x = ln(ctx @ wo + bo + query, ln1_g, ln1_b)
    out = ln(jnp.maximum(x @ w1 + b1, 0.0) @ w2 + b2 + x, ln2_g, ln2_b)
    return out, attn


if __name__ == "__main__":
    B, L = 2, 8
    root = jax.random.PRNGKey(0)
    k_in, k_par = jax.random.split(root, 2)

    x = jax.random.normal(k_in, (B, L, D_MODEL), jnp.float32)
    # mask: 1 = attend, 0 = masked; last two key positions of batch 1 masked.
    mask = jnp.ones((B, L, L), jnp.float32)
    mask = mask.at[1, :, -2:].set(0.0)

    raw_params = init_params(k_par)
    packed = pack_params(raw_params)

    enc_out, attn_vals = layer_forward(x, x, x, mask, packed)
    jax.block_until_ready((enc_out, attn_vals))

    ref_out, ref_attn = layer_forward_ref(x, x, x, mask, raw_params)
    np.testing.assert_allclose(np.asarray(enc_out), np.asarray(ref_out),
                               rtol=1e-3, atol=1e-3)
    np.testing.assert_allclose(np.asarray(attn_vals), np.asarray(ref_attn),
                               rtol=1e-3, atol=1e-3)

    # Optional-attention path (drops the attention-map writeback entirely).
    enc_only = layer_forward(x, x, x, mask, packed, return_attention=False)
    jax.block_until_ready(enc_only)
    np.testing.assert_allclose(np.asarray(enc_only), np.asarray(ref_out),
                               rtol=1e-3, atol=1e-3)

    print("KERNEL_OK")
</pallas_src>

<mosaic_0001>
module attributes {stable_mosaic.version = 11 : i64} {
  func.func @_encoder_layer_kernel(%arg0: i32, %arg1: memref<16x32xf32, #tpu.memory_space<vmem>>, %arg2: memref<16x8xf32, #tpu.memory_space<vmem>>, %arg3: memref<32x96xf32, #tpu.memory_space<vmem>>, %arg4: memref<32x32xf32, #tpu.memory_space<vmem>>, %arg5: memref<32x64xf32, #tpu.memory_space<vmem>>, %arg6: memref<64x32xf32, #tpu.memory_space<vmem>>, %arg7: memref<8x128xf32, #tpu.memory_space<vmem>>, %arg8: memref<16x32xf32, #tpu.memory_space<vmem>>, %arg9: memref<2x8x32xf32, #tpu.memory_space<vmem>>) attributes {dimension_semantics = [#tpu.dimension_semantics<parallel>], iteration_bounds = array<i64: 1>, scalar_prefetch = 0 : i64, scratch_operands = 0 : i64, tpu.core_type = #tpu.core_type<tc>, window_params = [{transform_indices = @transform_0, window_bounds = array<i64: 16, 32>}, {transform_indices = @transform_1, window_bounds = array<i64: 16, 8>}, {pipeline_mode = #tpu.pipeline_mode<synchronous>, transform_indices = @transform_2, window_bounds = array<i64: 32, 96>}, {pipeline_mode = #tpu.pipeline_mode<synchronous>, transform_indices = @transform_3, window_bounds = array<i64: 32, 32>}, {pipeline_mode = #tpu.pipeline_mode<synchronous>, transform_indices = @transform_4, window_bounds = array<i64: 32, 64>}, {pipeline_mode = #tpu.pipeline_mode<synchronous>, transform_indices = @transform_5, window_bounds = array<i64: 64, 32>}, {pipeline_mode = #tpu.pipeline_mode<synchronous>, transform_indices = @transform_6, window_bounds = array<i64: 8, 128>}, {transform_indices = @transform_7, window_bounds = array<i64: 16, 32>}, {transform_indices = @transform_8, window_bounds = array<i64: 2, 8, 32>}]} {
    %c0 = arith.constant 0 : index
    %c0_0 = arith.constant 0 : index
    %0 = vector.load %arg1[%c0, %c0_0] : memref<16x32xf32, #tpu.memory_space<vmem>>, vector<16x32xf32>
    %c0_1 = arith.constant 0 : index
    %c0_2 = arith.constant 0 : index
    %1 = vector.load %arg2[%c0_1, %c0_2] : memref<16x8xf32, #tpu.memory_space<vmem>>, vector<16x8xf32>
    %2 = vector.shape_cast %1 : vector<16x8xf32> to vector<2x8x8xf32>
    %c0_3 = arith.constant 0 : index
    %c0_4 = arith.constant 0 : index
    %3 = vector.load %arg3[%c0_3, %c0_4] : memref<32x96xf32, #tpu.memory_space<vmem>>, vector<32x96xf32>
    %cst = arith.constant dense<0.000000e+00> : vector<16x96xf32>
    %4 = tpu.matmul %0, %3, %cst {dimension_numbers = #tpu.dot_dimension_numbers<[1], [0], [0], [1], [0, 0, 1, 1], [], []>} : vector<16x32xf32>, vector<32x96xf32>, vector<16x96xf32> -> vector<16x96xf32>
    %c0_5 = arith.constant 0 : index
    %c0_6 = arith.constant 0 : index
    %5 = vector.load %arg7[%c0_5, %c0_6] : memref<8x128xf32, #tpu.memory_space<vmem>>, vector<1x96xf32>
    %6 = vector.broadcast %5 : vector<1x96xf32> to vector<16x96xf32>
    %7 = arith.addf %4, %6 : vector<16x96xf32>
    %8 = vector.shape_cast %7 : vector<16x96xf32> to vector<2x8x96xf32>
    %c0_7 = arith.constant 0 : index
    %c0_8 = arith.constant 0 : index
    %9 = vector.load %arg4[%c0_7, %c0_8] : memref<32x32xf32, #tpu.memory_space<vmem>>, vector<32x32xf32>
    %c1 = arith.constant 1 : index
    %c0_9 = arith.constant 0 : index
    %10 = vector.load %arg7[%c1, %c0_9] : memref<8x128xf32, #tpu.memory_space<vmem>>, vector<1x32xf32>
    %11 = vector.broadcast %10 : vector<1x32xf32> to vector<16x32xf32>
    %12 = arith.addf %0, %11 : vector<16x32xf32>
    %13 = vector.extract_strided_slice %8 {offsets = [0, 0, 0], sizes = [2, 8, 8], strides = [1, 1, 1]} : vector<2x8x96xf32> to vector<2x8x8xf32>
    %14 = vector.extract_strided_slice %8 {offsets = [0, 0, 32], sizes = [2, 8, 8], strides = [1, 1, 1]} : vector<2x8x96xf32> to vector<2x8x8xf32>
    %15 = vector.extract_strided_slice %8 {offsets = [0, 0, 64], sizes = [2, 8, 8], strides = [1, 1, 1]} : vector<2x8x96xf32> to vector<2x8x8xf32>
    "tpu.trace_start"() <{level = 10 : i32, message = "bqd,bkd->bqk"}> : () -> ()
    %cst_10 = arith.constant dense<0.000000e+00> : vector<2x8x8xf32>
    %16 = tpu.matmul %13, %14, %cst_10 {dimension_numbers = #tpu.dot_dimension_numbers<[2], [2], [1], [1], [0, 0, 0, 1, 1, 1], [0], [0]>} : vector<2x8x8xf32>, vector<2x8x8xf32>, vector<2x8x8xf32> -> vector<2x8x8xf32>
    "tpu.trace_stop"() : () -> ()
    %17 = arith.addf %16, %2 : vector<2x8x8xf32>
    %cst_11 = arith.constant dense<0xFF800000> : vector<2x8xf32>
    %18 = vector.multi_reduction <maximumf>, %17, %cst_11 [2] : vector<2x8x8xf32> to vector<2x8xf32>
    %19 = vector.shape_cast %18 : vector<2x8xf32> to vector<2x8x1xf32>
    %20 = vector.broadcast %19 : vector<2x8x1xf32> to vector<2x8x8xf32>
    %21 = arith.subf %17, %20 : vector<2x8x8xf32>
    %22 = math.exp %21 : vector<2x8x8xf32>
    %cst_12 = arith.constant dense<0.000000e+00> : vector<2x8xf32>
    %23 = vector.multi_reduction <add>, %22, %cst_12 [2] : vector<2x8x8xf32> to vector<2x8xf32>
    %24 = vector.shape_cast %23 : vector<2x8xf32> to vector<2x8x1xf32>
    %25 = vector.broadcast %24 : vector<2x8x1xf32> to vector<2x8x8xf32>
    %26 = arith.divf %22, %25 : vector<2x8x8xf32>
    "tpu.trace_start"() <{level = 10 : i32, message = "bqk,bkd->bqd"}> : () -> ()
    %cst_13 = arith.constant dense<0.000000e+00> : vector<2x8x8xf32>
    %27 = tpu.matmul %26, %15, %cst_13 {dimension_numbers = #tpu.dot_dimension_numbers<[2], [1], [1], [2], [0, 0, 0, 1, 1, 2], [0], [0]>} : vector<2x8x8xf32>, vector<2x8x8xf32>, vector<2x8x8xf32> -> vector<2x8x8xf32>
    "tpu.trace_stop"() : () -> ()
    %28 = vector.shape_cast %27 : vector<2x8x8xf32> to vector<16x8xf32>
    %29 = vector.extract_strided_slice %9 {offsets = [0, 0], sizes = [8, 32], strides = [1, 1]} : vector<32x32xf32> to vector<8x32xf32>
    %cst_14 = arith.constant dense<0.000000e+00> : vector<16x32xf32>
    %30 = tpu.matmul %28, %29, %cst_14 {dimension_numbers = #tpu.dot_dimension_numbers<[1], [0], [0], [1], [0, 0, 1, 1], [], []>} : vector<16x8xf32>, vector<8x32xf32>, vector<16x32xf32> -> vector<16x32xf32>
    %31 = arith.addf %12, %30 : vector<16x32xf32>
    %32 = vector.extract_strided_slice %8 {offsets = [0, 0, 8], sizes = [2, 8, 8], strides = [1, 1, 1]} : vector<2x8x96xf32> to vector<2x8x8xf32>
    %33 = vector.extract_strided_slice %8 {offsets = [0, 0, 40], sizes = [2, 8, 8], strides = [1, 1, 1]} : vector<2x8x96xf32> to vector<2x8x8xf32>
    %34 = vector.extract_strided_slice %8 {offsets = [0, 0, 72], sizes = [2, 8, 8], strides = [1, 1, 1]} : vector<2x8x96xf32> to vector<2x8x8xf32>
    "tpu.trace_start"() <{level = 10 : i32, message = "bqd,bkd->bqk"}> : () -> ()
    %cst_15 = arith.constant dense<0.000000e+00> : vector<2x8x8xf32>
    %35 = tpu.matmul %32, %33, %cst_15 {dimension_numbers = #tpu.dot_dimension_numbers<[2], [2], [1], [1], [0, 0, 0, 1, 1, 1], [0], [0]>} : vector<2x8x8xf32>, vector<2x8x8xf32>, vector<2x8x8xf32> -> vector<2x8x8xf32>
    "tpu.trace_stop"() : () -> ()
    %36 = arith.addf %35, %2 : vector<2x8x8xf32>
    %cst_16 = arith.constant dense<0xFF800000> : vector<2x8xf32>
    %37 = vector.multi_reduction <maximumf>, %36, %cst_16 [2] : vector<2x8x8xf32> to vector<2x8xf32>
    %38 = vector.shape_cast %37 : vector<2x8xf32> to vector<2x8x1xf32>
    %39 = vector.broadcast %38 : vector<2x8x1xf32> to vector<2x8x8xf32>
    %40 = arith.subf %36, %39 : vector<2x8x8xf32>
    %41 = math.exp %40 : vector<2x8x8xf32>
    %cst_17 = arith.constant dense<0.000000e+00> : vector<2x8xf32>
    %42 = vector.multi_reduction <add>, %41, %cst_17 [2] : vector<2x8x8xf32> to vector<2x8xf32>
    %43 = vector.shape_cast %42 : vector<2x8xf32> to vector<2x8x1xf32>
    %44 = vector.broadcast %43 : vector<2x8x1xf32> to vector<2x8x8xf32>
    %45 = arith.divf %41, %44 : vector<2x8x8xf32>
    "tpu.trace_start"() <{level = 10 : i32, message = "bqk,bkd->bqd"}> : () -> ()
    %cst_18 = arith.constant dense<0.000000e+00> : vector<2x8x8xf32>
    %46 = tpu.matmul %45, %34, %cst_18 {dimension_numbers = #tpu.dot_dimension_numbers<[2], [1], [1], [2], [0, 0, 0, 1, 1, 2], [0], [0]>} : vector<2x8x8xf32>, vector<2x8x8xf32>, vector<2x8x8xf32> -> vector<2x8x8xf32>
    "tpu.trace_stop"() : () -> ()
    %47 = vector.shape_cast %46 : vector<2x8x8xf32> to vector<16x8xf32>
    %48 = vector.extract_strided_slice %9 {offsets = [8, 0], sizes = [8, 32], strides = [1, 1]} : vector<32x32xf32> to vector<8x32xf32>
    %cst_19 = arith.constant dense<0.000000e+00> : vector<16x32xf32>
    %49 = tpu.matmul %47, %48, %cst_19 {dimension_numbers = #tpu.dot_dimension_numbers<[1], [0], [0], [1], [0, 0, 1, 1], [], []>} : vector<16x8xf32>, vector<8x32xf32>, vector<16x32xf32> -> vector<16x32xf32>
    %50 = arith.addf %31, %49 : vector<16x32xf32>
    %51 = vector.extract_strided_slice %8 {offsets = [0, 0, 16], sizes = [2, 8, 8], strides = [1, 1, 1]} : vector<2x8x96xf32> to vector<2x8x8xf32>
    %52 = vector.extract_strided_slice %8 {offsets = [0, 0, 48], sizes = [2, 8, 8], strides = [1, 1, 1]} : vector<2x8x96xf32> to vector<2x8x8xf32>
    %53 = vector.extract_strided_slice %8 {offsets = [0, 0, 80], sizes = [2, 8, 8], strides = [1, 1, 1]} : vector<2x8x96xf32> to vector<2x8x8xf32>
    "tpu.trace_start"() <{level = 10 : i32, message = "bqd,bkd->bqk"}> : () -> ()
    %cst_20 = arith.constant dense<0.000000e+00> : vector<2x8x8xf32>
    %54 = tpu.matmul %51, %52, %cst_20 {dimension_numbers = #tpu.dot_dimension_numbers<[2], [2], [1], [1], [0, 0, 0, 1, 1, 1], [0], [0]>} : vector<2x8x8xf32>, vector<2x8x8xf32>, vector<2x8x8xf32> -> vector<2x8x8xf32>
    "tpu.trace_stop"() : () -> ()
    %55 = arith.addf %54, %2 : vector<2x8x8xf32>
    %cst_21 = arith.constant dense<0xFF800000> : vector<2x8xf32>
    %56 = vector.multi_reduction <maximumf>, %55, %cst_21 [2] : vector<2x8x8xf32> to vector<2x8xf32>
    %57 = vector.shape_cast %56 : vector<2x8xf32> to vector<2x8x1xf32>
    %58 = vector.broadcast %57 : vector<2x8x1xf32> to vector<2x8x8xf32>
    %59 = arith.subf %55, %58 : vector<2x8x8xf32>
    %60 = math.exp %59 : vector<2x8x8xf32>
    %cst_22 = arith.constant dense<0.000000e+00> : vector<2x8xf32>
    %61 = vector.multi_reduction <add>, %60, %cst_22 [2] : vector<2x8x8xf32> to vector<2x8xf32>
    %62 = vector.shape_cast %61 : vector<2x8xf32> to vector<2x8x1xf32>
    %63 = vector.broadcast %62 : vector<2x8x1xf32> to vector<2x8x8xf32>
    %64 = arith.divf %60, %63 : vector<2x8x8xf32>
    "tpu.trace_start"() <{level = 10 : i32, message = "bqk,bkd->bqd"}> : () -> ()
    %cst_23 = arith.constant dense<0.000000e+00> : vector<2x8x8xf32>
    %65 = tpu.matmul %64, %53, %cst_23 {dimension_numbers = #tpu.dot_dimension_numbers<[2], [1], [1], [2], [0, 0, 0, 1, 1, 2], [0], [0]>} : vector<2x8x8xf32>, vector<2x8x8xf32>, vector<2x8x8xf32> -> vector<2x8x8xf32>
    "tpu.trace_stop"() : () -> ()
    %66 = vector.shape_cast %65 : vector<2x8x8xf32> to vector<16x8xf32>
    %67 = vector.extract_strided_slice %9 {offsets = [16, 0], sizes = [8, 32], strides = [1, 1]} : vector<32x32xf32> to vector<8x32xf32>
    %cst_24 = arith.constant dense<0.000000e+00> : vector<16x32xf32>
    %68 = tpu.matmul %66, %67, %cst_24 {dimension_numbers = #tpu.dot_dimension_numbers<[1], [0], [0], [1], [0, 0, 1, 1], [], []>} : vector<16x8xf32>, vector<8x32xf32>, vector<16x32xf32> -> vector<16x32xf32>
    %69 = arith.addf %50, %68 : vector<16x32xf32>
    %70 = vector.extract_strided_slice %8 {offsets = [0, 0, 24], sizes = [2, 8, 8], strides = [1, 1, 1]} : vector<2x8x96xf32> to vector<2x8x8xf32>
    %71 = vector.extract_strided_slice %8 {offsets = [0, 0, 56], sizes = [2, 8, 8], strides = [1, 1, 1]} : vector<2x8x96xf32> to vector<2x8x8xf32>
    %72 = vector.extract_strided_slice %8 {offsets = [0, 0, 88], sizes = [2, 8, 8], strides = [1, 1, 1]} : vector<2x8x96xf32> to vector<2x8x8xf32>
    "tpu.trace_start"() <{level = 10 : i32, message = "bqd,bkd->bqk"}> : () -> ()
    %cst_25 = arith.constant dense<0.000000e+00> : vector<2x8x8xf32>
    %73 = tpu.matmul %70, %71, %cst_25 {dimension_numbers = #tpu.dot_dimension_numbers<[2], [2], [1], [1], [0, 0, 0, 1, 1, 1], [0], [0]>} : vector<2x8x8xf32>, vector<2x8x8xf32>, vector<2x8x8xf32> -> vector<2x8x8xf32>
    "tpu.trace_stop"() : () -> ()
    %74 = arith.addf %73, %2 : vector<2x8x8xf32>
    %cst_26 = arith.constant dense<0xFF800000> : vector<2x8xf32>
    %75 = vector.multi_reduction <maximumf>, %74, %cst_26 [2] : vector<2x8x8xf32> to vector<2x8xf32>
    %76 = vector.shape_cast %75 : vector<2x8xf32> to vector<2x8x1xf32>
    %77 = vector.broadcast %76 : vector<2x8x1xf32> to vector<2x8x8xf32>
    %78 = arith.subf %74, %77 : vector<2x8x8xf32>
    %79 = math.exp %78 : vector<2x8x8xf32>
    %cst_27 = arith.constant dense<0.000000e+00> : vector<2x8xf32>
    %80 = vector.multi_reduction <add>, %79, %cst_27 [2] : vector<2x8x8xf32> to vector<2x8xf32>
    %81 = vector.shape_cast %80 : vector<2x8xf32> to vector<2x8x1xf32>
    %82 = vector.broadcast %81 : vector<2x8x1xf32> to vector<2x8x8xf32>
    %83 = arith.divf %79, %82 : vector<2x8x8xf32>
    "tpu.trace_start"() <{level = 10 : i32, message = "bqk,bkd->bqd"}> : () -> ()
    %cst_28 = arith.constant dense<0.000000e+00> : vector<2x8x8xf32>
    %84 = tpu.matmul %83, %72, %cst_28 {dimension_numbers = #tpu.dot_dimension_numbers<[2], [1], [1], [2], [0, 0, 0, 1, 1, 2], [0], [0]>} : vector<2x8x8xf32>, vector<2x8x8xf32>, vector<2x8x8xf32> -> vector<2x8x8xf32>
    "tpu.trace_stop"() : () -> ()
    %85 = vector.shape_cast %84 : vector<2x8x8xf32> to vector<16x8xf32>
    %86 = vector.extract_strided_slice %9 {offsets = [24, 0], sizes = [8, 32], strides = [1, 1]} : vector<32x32xf32> to vector<8x32xf32>
    %cst_29 = arith.constant dense<0.000000e+00> : vector<16x32xf32>
    %87 = tpu.matmul %85, %86, %cst_29 {dimension_numbers = #tpu.dot_dimension_numbers<[1], [0], [0], [1], [0, 0, 1, 1], [], []>} : vector<16x8xf32>, vector<8x32xf32>, vector<16x32xf32> -> vector<16x32xf32>
    %88 = arith.addf %69, %87 : vector<16x32xf32>
    %89 = tpu.concatenate %26, %45, %64, %83 in 2 : vector<2x8x8xf32>, vector<2x8x8xf32>, vector<2x8x8xf32>, vector<2x8x8xf32> -> vector<2x8x32xf32>
    %c0_30 = arith.constant 0 : index
    %c0_31 = arith.constant 0 : index
    %c0_32 = arith.constant 0 : index
    %90 = vector.load %arg9[%c0_30, %c0_31, %c0_32] : memref<2x8x32xf32, #tpu.memory_space<vmem>>, vector<2x8x32xf32>
    tpu.vector_store %arg9[%c0_30, %c0_31, %c0_32], %89 {strides = array<i32>} : memref<2x8x32xf32, #tpu.memory_space<vmem>>, vector<2x8x32xf32>,
    %c4 = arith.constant 4 : index
    %c0_33 = arith.constant 0 : index
    %91 = vector.load %arg7[%c4, %c0_33] : memref<8x128xf32, #tpu.memory_space<vmem>>, vector<1x32xf32>
    %c5 = arith.constant 5 : index
    %c0_34 = arith.constant 0 : index
    %92 = vector.load %arg7[%c5, %c0_34] : memref<8x128xf32, #tpu.memory_space<vmem>>, vector<1x32xf32>
    %cst_35 = arith.constant dense<0.000000e+00> : vector<16xf32>
    %93 = vector.multi_reduction <add>, %88, %cst_35 [1] : vector<16x32xf32> to vector<16xf32>
    %94 = vector.shape_cast %93 : vector<16xf32> to vector<16x1xf32>
    %cst_36 = arith.constant 3.200000e+01 : f32
    %95 = vector.broadcast %cst_36 : f32 to vector<16x1xf32>
    %96 = arith.divf %94, %95 : vector<16x1xf32>
    %97 = vector.broadcast %96 : vector<16x1xf32> to vector<16x32xf32>
    %98 = arith.subf %88, %97 : vector<16x32xf32>
    %99 = arith.mulf %98, %98 : vector<16x32xf32>
    %cst_37 = arith.constant dense<0.000000e+00> : vector<16xf32>
    %100 = vector.multi_reduction <add>, %99, %cst_37 [1] : vector<16x32xf32> to vector<16xf32>
    %101 = vector.shape_cast %100 : vector<16xf32> to vector<16x1xf32>
    %cst_38 = arith.constant 3.200000e+01 : f32
    %102 = vector.broadcast %cst_38 : f32 to vector<16x1xf32>
    %103 = arith.divf %101, %102 : vector<16x1xf32>
    %104 = vector.broadcast %96 : vector<16x1xf32> to vector<16x32xf32>
    %105 = arith.subf %88, %104 : vector<16x32xf32>
    %cst_39 = arith.constant 9.99999974E-6 : f32
    %106 = vector.broadcast %cst_39 : f32 to vector<16x1xf32>
    %107 = arith.addf %103, %106 : vector<16x1xf32>
    %108 = math.rsqrt %107 : vector<16x1xf32>
    %109 = vector.broadcast %108 : vector<16x1xf32> to vector<16x32xf32>
    %110 = arith.mulf %105, %109 : vector<16x32xf32>
    %111 = vector.broadcast %91 : vector<1x32xf32> to vector<16x32xf32>
    %112 = arith.mulf %110, %111 : vector<16x32xf32>
    %113 = vector.broadcast %92 : vector<1x32xf32> to vector<16x32xf32>
    %114 = arith.addf %112, %113 : vector<16x32xf32>
    %c0_40 = arith.constant 0 : index
    %c0_41 = arith.constant 0 : index
    %115 = vector.load %arg5[%c0_40, %c0_41] : memref<32x64xf32, #tpu.memory_space<vmem>>, vector<32x64xf32>
    %cst_42 = arith.constant dense<0.000000e+00> : vector<16x64xf32>
    %116 = tpu.matmul %114, %115, %cst_42 {dimension_numbers = #tpu.dot_dimension_numbers<[1], [0], [0], [1], [0, 0, 1, 1], [], []>} : vector<16x32xf32>, vector<32x64xf32>, vector<16x64xf32> -> vector<16x64xf32>
    %c2 = arith.constant 2 : index
    %c0_43 = arith.constant 0 : index
    %117 = vector.load %arg7[%c2, %c0_43] : memref<8x128xf32, #tpu.memory_space<vmem>>, vector<1x64xf32>
    %118 = vector.broadcast %117 : vector<1x64xf32> to vector<16x64xf32>
    %119 = arith.addf %116, %118 : vector<16x64xf32>
    %cst_44 = arith.constant 0.000000e+00 : f32
    %120 = vector.broadcast %cst_44 : f32 to vector<16x64xf32>
    %121 = arith.maximumf %119, %120 : vector<16x64xf32>
    %c0_45 = arith.constant 0 : index
    %c0_46 = arith.constant 0 : index
    %122 = vector.load %arg6[%c0_45, %c0_46] : memref<64x32xf32, #tpu.memory_space<vmem>>, vector<64x32xf32>
    %cst_47 = arith.constant dense<0.000000e+00> : vector<16x32xf32>
    %123 = tpu.matmul %121, %122, %cst_47 {dimension_numbers = #tpu.dot_dimension_numbers<[1], [0], [0], [1], [0, 0, 1, 1], [], []>} : vector<16x64xf32>, vector<64x32xf32>, vector<16x32xf32> -> vector<16x32xf32>
    %c3 = arith.constant 3 : index
    %c0_48 = arith.constant 0 : index
    %124 = vector.load %arg7[%c3, %c0_48] : memref<8x128xf32, #tpu.memory_space<vmem>>, vector<1x32xf32>
    %125 = vector.broadcast %124 : vector<1x32xf32> to vector<16x32xf32>
    %126 = arith.addf %123, %125 : vector<16x32xf32>
    %127 = arith.addf %126, %114 : vector<16x32xf32>
    %c6 = arith.constant 6 : index
    %c0_49 = arith.constant 0 : index
    %128 = vector.load %arg7[%c6, %c0_49] : memref<8x128xf32, #tpu.memory_space<vmem>>, vector<1x32xf32>
    %c7 = arith.constant 7 : index
    %c0_50 = arith.constant 0 : index
    %129 = vector.load %arg7[%c7, %c0_50] : memref<8x128xf32, #tpu.memory_space<vmem>>, vector<1x32xf32>
    %cst_51 = arith.constant dense<0.000000e+00> : vector<16xf32>
    %130 = vector.multi_reduction <add>, %127, %cst_51 [1] : vector<16x32xf32> to vector<16xf32>
    %131 = vector.shape_cast %130 : vector<16xf32> to vector<16x1xf32>
    %cst_52 = arith.constant 3.200000e+01 : f32
    %132 = vector.broadcast %cst_52 : f32 to vector<16x1xf32>
    %133 = arith.divf %131, %132 : vector<16x1xf32>
    %134 = vector.broadcast %133 : vector<16x1xf32> to vector<16x32xf32>
    %135 = arith.subf %127, %134 : vector<16x32xf32>
    %136 = arith.mulf %135, %135 : vector<16x32xf32>
    %cst_53 = arith.constant dense<0.000000e+00> : vector<16xf32>
    %137 = vector.multi_reduction <add>, %136, %cst_53 [1] : vector<16x32xf32> to vector<16xf32>
    %138 = vector.shape_cast %137 : vector<16xf32> to vector<16x1xf32>
    %cst_54 = arith.constant 3.200000e+01 : f32
    %139 = vector.broadcast %cst_54 : f32 to vector<16x1xf32>
    %140 = arith.divf %138, %139 : vector<16x1xf32>
    %141 = vector.broadcast %133 : vector<16x1xf32> to vector<16x32xf32>
    %142 = arith.subf %127, %141 : vector<16x32xf32>
    %cst_55 = arith.constant 9.99999974E-6 : f32
    %143 = vector.broadcast %cst_55 : f32 to vector<16x1xf32>
    %144 = arith.addf %140, %143 : vector<16x1xf32>
    %145 = math.rsqrt %144 : vector<16x1xf32>
    %146 = vector.broadcast %145 : vector<16x1xf32> to vector<16x32xf32>
    %147 = arith.mulf %142, %146 : vector<16x32xf32>
    %148 = vector.broadcast %128 : vector<1x32xf32> to vector<16x32xf32>
    %149 = arith.mulf %147, %148 : vector<16x32xf32>
    %150 = vector.broadcast %129 : vector<1x32xf32> to vector<16x32xf32>
    %151 = arith.addf %149, %150 : vector<16x32xf32>
    %c0_56 = arith.constant 0 : index
    %c0_57 = arith.constant 0 : index
    %152 = vector.load %arg8[%c0_56, %c0_57] : memref<16x32xf32, #tpu.memory_space<vmem>>, vector<16x32xf32>
    tpu.vector_store %arg8[%c0_56, %c0_57], %151 {strides = array<i32>} : memref<16x32xf32, #tpu.memory_space<vmem>>, vector<16x32xf32>,
    return
  }
  func.func @transform_0(%arg0: i32) -> (i32, i32) {
    %c0_i32 = arith.constant 0 : i32
    %c0_i32_0 = arith.constant 0 : i32
    return %arg0, %c0_i32 : i32, i32
  }
  func.func @transform_1(%arg0: i32) -> (i32, i32) {
    %c0_i32 = arith.constant 0 : i32
    %c0_i32_0 = arith.constant 0 : i32
    return %arg0, %c0_i32 : i32, i32
  }
  func.func @transform_2(%arg0: i32) -> (i32, i32) {
    %c0_i32 = arith.constant 0 : i32
    %c0_i32_0 = arith.constant 0 : i32
    %c0_i32_1 = arith.constant 0 : i32
    return %c0_i32, %c0_i32_0 : i32, i32
  }
  func.func @transform_3(%arg0: i32) -> (i32, i32) {
    %c0_i32 = arith.constant 0 : i32
    %c0_i32_0 = arith.constant 0 : i32
    %c0_i32_1 = arith.constant 0 : i32
    return %c0_i32, %c0_i32_0 : i32, i32
  }
  func.func @transform_4(%arg0: i32) -> (i32, i32) {
    %c0_i32 = arith.constant 0 : i32
    %c0_i32_0 = arith.constant 0 : i32
    %c0_i32_1 = arith.constant 0 : i32
    return %c0_i32, %c0_i32_0 : i32, i32
  }
  func.func @transform_5(%arg0: i32) -> (i32, i32) {
    %c0_i32 = arith.constant 0 : i32
    %c0_i32_0 = arith.constant 0 : i32
    %c0_i32_1 = arith.constant 0 : i32
    return %c0_i32, %c0_i32_0 : i32, i32
  }
  func.func @transform_6(%arg0: i32) -> (i32, i32) {
    %c0_i32 = arith.constant 0 : i32
    %c0_i32_0 = arith.constant 0 : i32
    %c0_i32_1 = arith.constant 0 : i32
    return %c0_i32, %c0_i32_0 : i32, i32
  }
  func.func @transform_7(%arg0: i32) -> (i32, i32) {
    %c0_i32 = arith.constant 0 : i32
    %c0_i32_0 = arith.constant 0 : i32
    return %arg0, %c0_i32 : i32, i32
  }
  func.func @transform_8(%arg0: i32) -> (i32, i32, i32) {
    %c0_i32 = arith.constant 0 : i32
    %c0_i32_0 = arith.constant 0 : i32
    %c0_i32_1 = arith.constant 0 : i32
    return %arg0, %c0_i32, %c0_i32_0 : i32, i32, i32
  }
}

</mosaic_0001>

<llo_original>
// kernel: _self_attn_forward.1
$region0: #{_self_attn_forward.1}
  #allocation0 [shape = 'u32[]', space=smem, size = 0x4, offset = 0x4, fixed_abs, tag = 'smem constant byte address 0x4 - core index']
  #allocation1 [shape = 'u32[144,128]{1,0:T(1,128)}', space=vmem, size = 0x12000, scoped, tag = 'internal scratch']
  %s0 = inlined_call_operand.vmem [shape: f32[16,32], index: 0, kind: input, shape index: {}]
  %s1 = inlined_call_operand.vmem [shape: f32[16,8], index: 1, kind: input, shape index: {}]
  %s2 = inlined_call_operand.vmem [shape: f32[32,96], index: 2, kind: input, shape index: {}]
  %s3 = inlined_call_operand.vmem [shape: f32[32,32], index: 3, kind: input, shape index: {}]
  %s4 = inlined_call_operand.vmem [shape: f32[32,64], index: 4, kind: input, shape index: {}]
  %s5 = inlined_call_operand.vmem [shape: f32[64,32], index: 5, kind: input, shape index: {}]
  %s6 = inlined_call_operand.vmem [shape: f32[8,128], index: 6, kind: input, shape index: {}]
  %s7 = inlined_call_operand.hbm [shape: f32[16,32], index: 7, kind: output, shape index: {0}]
  %s8 = inlined_call_operand.vmem [shape: f32[2,8,32], index: 8, kind: output, shape index: {1}]
  %9 = xla_tuple %s7, %s8
  %s10 = sld [smem:[#allocation0]]
  $region46: #{_self_attn_forward.1} parent=0
    _
  %s12 = ssub.s32 1, %s10
  %s13 = scalar_select 0, %s12, %s10
  $region1: #{_self_attn_forward.1} parent=0
    #allocation2 [shape = 'u8[8192]{0}', space=vmem, size = 0x2000, scoped, tag = 'output window, operand 0, single buffered']
    #allocation3 [shape = 's32[1]{0}', space=sflag, size = 0x4, scoped, tag = 'scoped memory for _self_attn_forward.1']
    %14 = vsyncpa [#allocation3], 0
    // Predicated region
    $region2: #{_self_attn_forward.1} parent=1 // pred_check
      _
    $region3: #{_self_attn_forward.1} parent=1 // pred_check_branch
      %16 = sbr.rel (0) target = $region5
    $region4: #{_self_attn_forward.1} parent=1 // pred_region
      _
    $region5: #{_self_attn_forward.1} parent=1 // pred_fallthru
      _
    // Predicated region
    $region6: #{_self_attn_forward.1} parent=1 // pred_check
      _
    $region7: #{_self_attn_forward.1} parent=1 // pred_check_branch
      %18 = sbr.rel (0) target = $region9
    $region8: #{_self_attn_forward.1} parent=1 // pred_region
      _
    $region9: #{_self_attn_forward.1} parent=1 // pred_fallthru
      _
    // Predicated region
    $region10: #{_self_attn_forward.1} parent=1 // pred_check
      _
    $region11: #{_self_attn_forward.1} parent=1 // pred_check_branch
      %20 = sbr.rel (0) target = $region13
    $region12: #{_self_attn_forward.1} parent=1 // pred_region
      _
    $region13: #{_self_attn_forward.1} parent=1 // pred_fallthru
      _
    // Predicated region
    $region14: #{_self_attn_forward.1} parent=1 // pred_check
      _
    $region15: #{_self_attn_forward.1} parent=1 // pred_check_branch
      %22 = sbr.rel (0) target = $region17
    $region16: #{_self_attn_forward.1} parent=1 // pred_region
      _
    $region17: #{_self_attn_forward.1} parent=1 // pred_fallthru
      _
    // Predicated region
    $region18: #{_self_attn_forward.1} parent=1 // pred_check
      _
    $region19: #{_self_attn_forward.1} parent=1 // pred_check_branch
      %24 = sbr.rel (0) target = $region21
    $region20: #{_self_attn_forward.1} parent=1 // pred_region
      _
    $region21: #{_self_attn_forward.1} parent=1 // pred_fallthru
      _
    // Predicated region
    $region22: #{_self_attn_forward.1} parent=1 // pred_check
      _
    $region23: #{_self_attn_forward.1} parent=1 // pred_check_branch
      %26 = sbr.rel (0) target = $region25
    $region24: #{_self_attn_forward.1} parent=1 // pred_region
      _
    $region25: #{_self_attn_forward.1} parent=1 // pred_fallthru
      _
    // Predicated region
    $region26: #{_self_attn_forward.1} parent=1 // pred_check
      _
    $region27: #{_self_attn_forward.1} parent=1 // pred_check_branch
      %28 = sbr.rel (0) target = $region29
    $region28: #{_self_attn_forward.1} parent=1 // pred_region
      _
    $region29: #{_self_attn_forward.1} parent=1 // pred_fallthru
      _
    %v29 = vld [vmem:[%s0] sm:$0xff]
    %v30 = vld [vmem:[%s0 + $0x8] sm:$0xff]
    %v31 = vld [vmem:[%s1] sm:$0xff]
    %v32 = vld [vmem:[%s1 + $0x8] sm:$0xff]
    %v33 = vld [vmem:[%s2] sm:$0xff]
    %v34 = vld [vmem:[%s2 + $0x8] sm:$0xff]
    %v35 = vld [vmem:[%s2 + $0x10] sm:$0xff]
    %v36 = vld [vmem:[%s2 + $0x18] sm:$0xff]
    %v37 = vld [vmem:[%s6] sm:$0x1]
    %v38 = vlaneseq
    %v39 = vshrl.u32 %v38, 7
    %v40 = vsub.s32 0, %v39
    %v41 = vrot.slane %v37, %v40
    %vm42 = vcmask 261120
    %v44 = vsel %vm42, %v29, 0
    %v47 = vsel %vm42, %v30, 0
    %49 = vmatprep.subr.mxu0 0.0
    %50 = vmatpush1.msra.mxu0 %v33
    %51 = vmatprep.subr.mxu0 0.0
    %52 = vmatpush1.msra.mxu0 %v34
    %53 = vmatprep.subr.mxu0 0.0
    %54 = vmatpush1.msra.mxu0 %v35
    %55 = vmatprep.subr.mxu0 0.0
    %56 = vmatpush1.msra.mxu0 %v36
    %57 = vmatprep.subr.mxu0 0.0
    %58 = vmatpush1.msra.mxu0 0.0
    %59 = vmatprep.subr.mxu0 0.0
    %60 = vmatpush1.msra.mxu0 0.0
    %61 = vmatprep.subr.mxu0 0.0
    %62 = vmatpush1.msra.mxu0 0.0
    %63 = vmatprep.subr.mxu0 0.0
    %64 = vmatpush1.msra.mxu0 0.0
    %65 = vmatprep.subr.mxu0 0.0
    %66 = vmatpush1.msra.mxu0 0.0
    %67 = vmatprep.subr.mxu0 0.0
    %68 = vmatpush1.msra.mxu0 0.0
    %69 = vmatprep.subr.mxu0 0.0
    %70 = vmatpush1.msra.mxu0 0.0
    %71 = vmatprep.subr.mxu0 0.0
    %72 = vmatpush1.msra.mxu0 0.0
    %73 = vmatprep.subr.mxu0 0.0
    %74 = vmatpush1.msra.mxu0 0.0
    %75 = vmatprep.subr.mxu0 0.0
    %76 = vmatpush1.msra.mxu0 0.0
    %77 = vmatprep.subr.mxu0 0.0
    %78 = vmatpush1.msra.mxu0 0.0
    %79 = vmatprep.subr.mxu0 0.0
    %80 = vmatpush1.msra.mxu0 0.0
    %81 = vmatprep.subr.mxu0 0.0
    %82 = vmatpush1.msra.mxu0 0.0
    %83 = vmatprep.subr.mxu0 0.0
    %84 = vmatpush1.msra.mxu0 0.0
    %85 = vmatprep.subr.mxu0 0.0
    %86 = vmatpush1.msra.mxu0 0.0
    %87 = vmatprep.subr.mxu0 0.0
    %88 = vmatpush1.msra.mxu0 0.0
    %89 = vmatprep.subr.mxu0 0.0
    %90 = vmatpush1.msra.mxu0 0.0
    %91 = vmatprep.subr.mxu0 0.0
    %92 = vmatpush1.msra.mxu0 0.0
    %93 = vmatprep.subr.mxu0 0.0
    %94 = vmatpush1.msra.mxu0 0.0
    %95 = vmatprep.subr.mxu0 0.0
    %96 = vmatpush1.msra.mxu0 0.0
    %97 = vmatprep.subr.mxu0 0.0
    %98 = vmatpush1.msra.mxu0 0.0
    %99 = vmatprep.subr.mxu0 0.0
    %100 = vmatpush1.msra.mxu0 0.0
    %101 = vmatprep.subr.mxu0 0.0
    %102 = vmatpush1.msra.mxu0 0.0
    %103 = vmatprep.subr.mxu0 0.0
    %104 = vmatpush1.msra.mxu0 0.0
    %105 = vmatprep.subr.mxu0 0.0
    %106 = vmatpush1.msra.mxu0 0.0
    %107 = vmatprep.subr.mxu0 0.0
    %108 = vmatpush1.msra.mxu0 0.0
    %109 = vmatprep.subr.mxu0 0.0
    %110 = vmatpush1.msra.mxu0 0.0
    %111 = vmatprep.subr.mxu0 0.0
    %112 = vmatpush1.msra.mxu0 0.0
    %113 = vmatprep.mubr.f32.mxu0 0.0
    %114 = vmatmul.mubr.f32.gmra.mrb[0].mxu0 %v44
    %v115 = vpop.f32.mrb[0].mxu0
    %v116 = vadd.f32 %v41, %v115
    %v117 = vpop.f32.mrb[0].mxu0
    %118 = vmatprep.mubr.f32.mxu0 0.0
    %119 = vmatmul.mubr.f32.gmra.mrb[0].mxu0 %v47
    %v120 = vpop.f32.mrb[0].mxu0
    %v121 = vadd.f32 %v41, %v120
    %v122 = vpop.f32.mrb[0].mxu0
    %123 = vdwg.mxu0
    %v124 = vld [vmem:[%s3] sm:$0xff]
    %v125 = vld [vmem:[%s3 + $0x8] sm:$0xff]
    %v126 = vld [vmem:[%s3 + $0x10] sm:$0xff]
    %v127 = vld [vmem:[%s3 + $0x18] sm:$0xff]
    %v128 = vld [vmem:[%s6 + $0x1] sm:$0x1]
    %v129 = vlaneseq
    %v130 = vshrl.u32 %v129, 7
    %v131 = vsub.s32 0, %v130
    %v132 = vrot.slane %v128, %v131
    %v133 = vadd.f32 %v29, %v132
    %v134 = vadd.f32 %v30, %v132
    %136 = vrot.lane.b32.xlu0 %v116, 96
    %v137 = vpop.permute.xlu0 %136
    %vm138 = vcmask 64512
    %v139 = vsel %vm138, %v116, 0
    %v141 = vsel %vm138, %v137, 0
    %143 = vmatprep.subr.mxu0 0.0
    %144 = vmatpush1.xpose.msra.mxu0 %v141
    %145 = vmatprep.subr.mxu0 0.0
    %146 = vmatpush1.xpose.msra.mxu0 0.0
    %147 = vmatprep.subr.mxu0 0.0
    %148 = vmatpush1.xpose.msra.mxu0 0.0
    %149 = vmatprep.subr.mxu0 0.0
    %150 = vmatpush1.xpose.msra.mxu0 0.0
    %151 = vmatprep.subr.mxu0 0.0
    %152 = vmatpush1.xpose.msra.mxu0 0.0
    %153 = vmatprep.subr.mxu0 0.0
    %154 = vmatpush1.xpose.msra.mxu0 0.0
    %155 = vmatprep.subr.mxu0 0.0
    %156 = vmatpush1.xpose.msra.mxu0 0.0
    %157 = vmatprep.subr.mxu0 0.0
    %158 = vmatpush1.xpose.msra.mxu0 0.0
    %159 = vmatprep.subr.mxu0 0.0
    %160 = vmatpush1.xpose.msra.mxu0 0.0
    %161 = vmatprep.subr.mxu0 0.0
    %162 = vmatpush1.xpose.msra.mxu0 0.0
    %163 = vmatprep.subr.mxu0 0.0
    %164 = vmatpush1.xpose.msra.mxu0 0.0
    %165 = vmatprep.subr.mxu0 0.0
    %166 = vmatpush1.xpose.msra.mxu0 0.0
    %167 = vmatprep.subr.mxu0 0.0
    %168 = vmatpush1.xpose.msra.mxu0 0.0
    %169 = vmatprep.subr.mxu0 0.0
    %170 = vmatpush1.xpose.msra.mxu0 0.0
    %171 = vmatprep.subr.mxu0 0.0
    %172 = vmatpush1.xpose.msra.mxu0 0.0
    %173 = vmatprep.subr.mxu0 0.0
    %174 = vmatpush1.xpose.msra.mxu0 0.0
    %175 = vmatprep.subr.mxu0 0.0
    %176 = vmatpush1.xpose.msra.mxu0 0.0
    %177 = vmatprep.subr.mxu0 0.0
    %178 = vmatpush1.xpose.msra.mxu0 0.0
    %179 = vmatprep.subr.mxu0 0.0
    %180 = vmatpush1.xpose.msra.mxu0 0.0
    %181 = vmatprep.subr.mxu0 0.0
    %182 = vmatpush1.xpose.msra.mxu0 0.0
    %183 = vmatprep.subr.mxu0 0.0
    %184 = vmatpush1.xpose.msra.mxu0 0.0
    %185 = vmatprep.subr.mxu0 0.0
    %186 = vmatpush1.xpose.msra.mxu0 0.0
    %187 = vmatprep.subr.mxu0 0.0
    %188 = vmatpush1.xpose.msra.mxu0 0.0
    %189 = vmatprep.subr.mxu0 0.0
    %190 = vmatpush1.xpose.msra.mxu0 0.0
    %191 = vmatprep.subr.mxu0 0.0
    %192 = vmatpush1.xpose.msra.mxu0 0.0
    %193 = vmatprep.subr.mxu0 0.0
    %194 = vmatpush1.xpose.msra.mxu0 0.0
    %195 = vmatprep.subr.mxu0 0.0
    %196 = vmatpush1.xpose.msra.mxu0 0.0
    %197 = vmatprep.subr.mxu0 0.0
    %198 = vmatpush1.xpose.msra.mxu0 0.0
    %199 = vmatprep.subr.mxu0 0.0
    %200 = vmatpush1.xpose.msra.mxu0 0.0
    %201 = vmatprep.subr.mxu0 0.0
    %202 = vmatpush1.xpose.msra.mxu0 0.0
    %203 = vmatprep.subr.mxu0 0.0
    %204 = vmatpush1.xpose.msra.mxu0 0.0
    %205 = vmatprep.subr.mxu0 0.0
    %206 = vmatpush1.xpose.msra.mxu0 0.0
    %207 = vmatprep.mubr.f32.mxu0 0.0
    %208 = vmatmul.mubr.f32.gmra.mrb[0].mxu0 %v139
    %v209 = vpop.f32.mrb[0].mxu0
    %v210 = vadd.f32 %v31, %v209
    %v211 = vpop.f32.mrb[0].mxu0
    %212 = vdwg.mxu0
    %214 = vrot.lane.b32.xlu0 %v121, 96
    %v215 = vpop.permute.xlu0 %214
    %v216 = vsel %vm138, %v121, 0
    %v218 = vsel %vm138, %v215, 0
    %220 = vmatprep.subr.mxu0 0.0
    %221 = vmatpush1.xpose.msra.mxu0 %v218
    %222 = vmatprep.subr.mxu0 0.0
    %223 = vmatpush1.xpose.msra.mxu0 0.0
    %224 = vmatprep.subr.mxu0 0.0
    %225 = vmatpush1.xpose.msra.mxu0 0.0
    %226 = vmatprep.subr.mxu0 0.0
    %227 = vmatpush1.xpose.msra.mxu0 0.0
    %228 = vmatprep.subr.mxu0 0.0
    %229 = vmatpush1.xpose.msra.mxu0 0.0
    %230 = vmatprep.subr.mxu0 0.0
    %231 = vmatpush1.xpose.msra.mxu0 0.0
    %232 = vmatprep.subr.mxu0 0.0
    %233 = vmatpush1.xpose.msra.mxu0 0.0
    %234 = vmatprep.subr.mxu0 0.0
    %235 = vmatpush1.xpose.msra.mxu0 0.0
    %236 = vmatprep.subr.mxu0 0.0
    %237 = vmatpush1.xpose.msra.mxu0 0.0
    %238 = vmatprep.subr.mxu0 0.0
    %239 = vmatpush1.xpose.msra.mxu0 0.0
    %240 = vmatprep.subr.mxu0 0.0
    %241 = vmatpush1.xpose.msra.mxu0 0.0
    %242 = vmatprep.subr.mxu0 0.0
    %243 = vmatpush1.xpose.msra.mxu0 0.0
    %244 = vmatprep.subr.mxu0 0.0
    %245 = vmatpush1.xpose.msra.mxu0 0.0
    %246 = vmatprep.subr.mxu0 0.0
    %247 = vmatpush1.xpose.msra.mxu0 0.0
    %248 = vmatprep.subr.mxu0 0.0
    %249 = vmatpush1.xpose.msra.mxu0 0.0
    %250 = vmatprep.subr.mxu0 0.0
    %251 = vmatpush1.xpose.msra.mxu0 0.0
    %252 = vmatprep.subr.mxu0 0.0
    %253 = vmatpush1.xpose.msra.mxu0 0.0
    %254 = vmatprep.subr.mxu0 0.0
    %255 = vmatpush1.xpose.msra.mxu0 0.0
    %256 = vmatprep.subr.mxu0 0.0
    %257 = vmatpush1.xpose.msra.mxu0 0.0
    %258 = vmatprep.subr.mxu0 0.0
    %259 = vmatpush1.xpose.msra.mxu0 0.0
    %260 = vmatprep.subr.mxu0 0.0
    %261 = vmatpush1.xpose.msra.mxu0 0.0
    %262 = vmatprep.subr.mxu0 0.0
    %263 = vmatpush1.xpose.msra.mxu0 0.0
    %264 = vmatprep.subr.mxu0 0.0
    %265 = vmatpush1.xpose.msra.mxu0 0.0
    %266 = vmatprep.subr.mxu0 0.0
    %267 = vmatpush1.xpose.msra.mxu0 0.0
    %268 = vmatprep.subr.mxu0 0.0
    %269 = vmatpush1.xpose.msra.mxu0 0.0
    %270 = vmatprep.subr.mxu0 0.0
    %271 = vmatpush1.xpose.msra.mxu0 0.0
    %272 = vmatprep.subr.mxu0 0.0
    %273 = vmatpush1.xpose.msra.mxu0 0.0
    %274 = vmatprep.subr.mxu0 0.0
    %275 = vmatpush1.xpose.msra.mxu0 0.0
    %276 = vmatprep.subr.mxu0 0.0
    %277 = vmatpush1.xpose.msra.mxu0 0.0
    %278 = vmatprep.subr.mxu0 0.0
    %279 = vmatpush1.xpose.msra.mxu0 0.0
    %280 = vmatprep.subr.mxu0 0.0
    %281 = vmatpush1.xpose.msra.mxu0 0.0
    %282 = vmatprep.subr.mxu0 0.0
    %283 = vmatpush1.xpose.msra.mxu0 0.0
    %284 = vmatprep.mubr.f32.mxu0 0.0
    %285 = vmatmul.mubr.f32.gmra.mrb[0].mxu0 %v216
    %v286 = vpop.f32.mrb[0].mxu0
    %v287 = vadd.f32 %v32, %v286
    %v288 = vpop.f32.mrb[0].mxu0
    %289 = vdwg.mxu0
    %v290 = vsel %vm138, %v210, -inf
    %291 = vmax.xlane.f32.xlu0 %v290
    %v292 = vpop.xlane.xlu0 %291
    %v293 = vsel %vm138, %v287, -inf
    %294 = vmax.xlane.f32.xlu0 %v293
    %v295 = vpop.xlane.xlu0 %294
    %v296 = vsub.f32 %v210, %v292
    %v297 = vsub.f32 %v287, %v295
    %v298 = vmul.f32 %v296, 1.442695
    %v299 = vpow.pop %v298
    %v300 = vmul.f32 %v297, 1.442695
    %v301 = vpow.pop %v300
    %v302 = vsel %vm138, %v299, 0.0
    %303 = vadd.xlane.f32.xlu0 %v302
    %v304 = vpop.xlane.xlu0 %303
    %v305 = vsel %vm138, %v301, 0.0
    %306 = vadd.xlane.f32.xlu0 %v305
    %v307 = vpop.xlane.xlu0 %306
    %v308 = vrcp.pop %v304
    %v309 = vmul.f32 %v299, %v308
    %v310 = vrcp.pop %v307
    %v311 = vmul.f32 %v301, %v310
    %312 = vrot.lane.b32.xlu0 %v116, 64
    %v313 = vpop.permute.xlu0 %312
    %v316 = vsel %vm138, %v309, 0
    %318 = vmatprep.subr.mxu0 0.0
    %319 = vmatpush1.msra.mxu0 %v313
    %320 = vmatprep.subr.mxu0 0.0
    %321 = vmatpush1.msra.mxu0 0.0
    %322 = vmatprep.subr.mxu0 0.0
    %323 = vmatpush1.msra.mxu0 0.0
    %324 = vmatprep.subr.mxu0 0.0
    %325 = vmatpush1.msra.mxu0 0.0
    %326 = vmatprep.subr.mxu0 0.0
    %327 = vmatpush1.msra.mxu0 0.0
    %328 = vmatprep.subr.mxu0 0.0
    %329 = vmatpush1.msra.mxu0 0.0
    %330 = vmatprep.subr.mxu0 0.0
    %331 = vmatpush1.msra.mxu0 0.0
    %332 = vmatprep.subr.mxu0 0.0
    %333 = vmatpush1.msra.mxu0 0.0
    %334 = vmatprep.subr.mxu0 0.0
    %335 = vmatpush1.msra.mxu0 0.0
    %336 = vmatprep.subr.mxu0 0.0
    %337 = vmatpush1.msra.mxu0 0.0
    %338 = vmatprep.subr.mxu0 0.0
    %339 = vmatpush1.msra.mxu0 0.0
    %340 = vmatprep.subr.mxu0 0.0
    %341 = vmatpush1.msra.mxu0 0.0
    %342 = vmatprep.subr.mxu0 0.0
    %343 = vmatpush1.msra.mxu0 0.0
    %344 = vmatprep.subr.mxu0 0.0
    %345 = vmatpush1.msra.mxu0 0.0
    %346 = vmatprep.subr.mxu0 0.0
    %347 = vmatpush1.msra.mxu0 0.0
    %348 = vmatprep.subr.mxu0 0.0
    %349 = vmatpush1.msra.mxu0 0.0
    %350 = vmatprep.subr.mxu0 0.0
    %351 = vmatpush1.msra.mxu0 0.0
    %352 = vmatprep.subr.mxu0 0.0
    %353 = vmatpush1.msra.mxu0 0.0
    %354 = vmatprep.subr.mxu0 0.0
    %355 = vmatpush1.msra.mxu0 0.0
    %356 = vmatprep.subr.mxu0 0.0
    %357 = vmatpush1.msra.mxu0 0.0
    %358 = vmatprep.subr.mxu0 0.0
    %359 = vmatpush1.msra.mxu0 0.0
    %360 = vmatprep.subr.mxu0 0.0
    %361 = vmatpush1.msra.mxu0 0.0
    %362 = vmatprep.subr.mxu0 0.0
    %363 = vmatpush1.msra.mxu0 0.0
    %364 = vmatprep.subr.mxu0 0.0
    %365 = vmatpush1.msra.mxu0 0.0
    %366 = vmatprep.subr.mxu0 0.0
    %367 = vmatpush1.msra.mxu0 0.0
    %368 = vmatprep.subr.mxu0 0.0
    %369 = vmatpush1.msra.mxu0 0.0
    %370 = vmatprep.subr.mxu0 0.0
    %371 = vmatpush1.msra.mxu0 0.0
    %372 = vmatprep.subr.mxu0 0.0
    %373 = vmatpush1.msra.mxu0 0.0
    %374 = vmatprep.subr.mxu0 0.0
    %375 = vmatpush1.msra.mxu0 0.0
    %376 = vmatprep.subr.mxu0 0.0
    %377 = vmatpush1.msra.mxu0 0.0
    %378 = vmatprep.subr.mxu0 0.0
    %379 = vmatpush1.msra.mxu0 0.0
    %380 = vmatprep.subr.mxu0 0.0
    %381 = vmatpush1.msra.mxu0 0.0
    %382 = vmatprep.mubr.f32.mxu0 0.0
    %383 = vmatmul.mubr.f32.gmra.mrb[0].mxu0 %v316
    %v384 = vpop.f32.mrb[0].mxu0
    %v385 = vadd.f32 0.0, %v384
    %v386 = vpop.f32.mrb[0].mxu0
    %387 = vdwg.mxu0
    %388 = vrot.lane.b32.xlu0 %v121, 64
    %v389 = vpop.permute.xlu0 %388
    %v392 = vsel %vm138, %v311, 0
    %394 = vmatprep.subr.mxu0 0.0
    %395 = vmatpush1.msra.mxu0 %v389
    %396 = vmatprep.subr.mxu0 0.0
    %397 = vmatpush1.msra.mxu0 0.0
    %398 = vmatprep.subr.mxu0 0.0
    %399 = vmatpush1.msra.mxu0 0.0
    %400 = vmatprep.subr.mxu0 0.0
    %401 = vmatpush1.msra.mxu0 0.0
    %402 = vmatprep.subr.mxu0 0.0
    %403 = vmatpush1.msra.mxu0 0.0
    %404 = vmatprep.subr.mxu0 0.0
    %405 = vmatpush1.msra.mxu0 0.0
    %406 = vmatprep.subr.mxu0 0.0
    %407 = vmatpush1.msra.mxu0 0.0
    %408 = vmatprep.subr.mxu0 0.0
    %409 = vmatpush1.msra.mxu0 0.0
    %410 = vmatprep.subr.mxu0 0.0
    %411 = vmatpush1.msra.mxu0 0.0
    %412 = vmatprep.subr.mxu0 0.0
    %413 = vmatpush1.msra.mxu0 0.0
    %414 = vmatprep.subr.mxu0 0.0
    %415 = vmatpush1.msra.mxu0 0.0
    %416 = vmatprep.subr.mxu0 0.0
    %417 = vmatpush1.msra.mxu0 0.0
    %418 = vmatprep.subr.mxu0 0.0
    %419 = vmatpush1.msra.mxu0 0.0
    %420 = vmatprep.subr.mxu0 0.0
    %421 = vmatpush1.msra.mxu0 0.0
    %422 = vmatprep.subr.mxu0 0.0
    %423 = vmatpush1.msra.mxu0 0.0
    %424 = vmatprep.subr.mxu0 0.0
    %425 = vmatpush1.msra.mxu0 0.0
    %426 = vmatprep.subr.mxu0 0.0
    %427 = vmatpush1.msra.mxu0 0.0
    %428 = vmatprep.subr.mxu0 0.0
    %429 = vmatpush1.msra.mxu0 0.0
    %430 = vmatprep.subr.mxu0 0.0
    %431 = vmatpush1.msra.mxu0 0.0
    %432 = vmatprep.subr.mxu0 0.0
    %433 = vmatpush1.msra.mxu0 0.0
    %434 = vmatprep.subr.mxu0 0.0
    %435 = vmatpush1.msra.mxu0 0.0
    %436 = vmatprep.subr.mxu0 0.0
    %437 = vmatpush1.msra.mxu0 0.0
    %438 = vmatprep.subr.mxu0 0.0
    %439 = vmatpush1.msra.mxu0 0.0
    %440 = vmatprep.subr.mxu0 0.0
    %441 = vmatpush1.msra.mxu0 0.0
    %442 = vmatprep.subr.mxu0 0.0
    %443 = vmatpush1.msra.mxu0 0.0
    %444 = vmatprep.subr.mxu0 0.0
    %445 = vmatpush1.msra.mxu0 0.0
    %446 = vmatprep.subr.mxu0 0.0
    %447 = vmatpush1.msra.mxu0 0.0
    %448 = vmatprep.subr.mxu0 0.0
    %449 = vmatpush1.msra.mxu0 0.0
    %450 = vmatprep.subr.mxu0 0.0
    %451 = vmatpush1.msra.mxu0 0.0
    %452 = vmatprep.subr.mxu0 0.0
    %453 = vmatpush1.msra.mxu0 0.0
    %454 = vmatprep.subr.mxu0 0.0
    %455 = vmatpush1.msra.mxu0 0.0
    %456 = vmatprep.subr.mxu0 0.0
    %457 = vmatpush1.msra.mxu0 0.0
    %458 = vmatprep.mubr.f32.mxu0 0.0
    %459 = vmatmul.mubr.f32.gmra.mrb[0].mxu0 %v392
    %v460 = vpop.f32.mrb[0].mxu0
    %v461 = vadd.f32 0.0, %v460
    %v462 = vpop.f32.mrb[0].mxu0
    %463 = vdwg.mxu0
    %v465 = vsel %vm138, %v385, 0
    %v468 = vsel %vm138, %v461, 0
    %470 = vmatprep.subr.mxu0 0.0
    %471 = vmatpush1.msra.mxu0 %v124
    %472 = vmatprep.subr.mxu0 0.0
    %473 = vmatpush1.msra.mxu0 0.0
    %474 = vmatprep.subr.mxu0 0.0
    %475 = vmatpush1.msra.mxu0 0.0
    %476 = vmatprep.subr.mxu0 0.0
    %477 = vmatpush1.msra.mxu0 0.0
    %478 = vmatprep.subr.mxu0 0.0
    %479 = vmatpush1.msra.mxu0 0.0
    %480 = vmatprep.subr.mxu0 0.0
    %481 = vmatpush1.msra.mxu0 0.0
    %482 = vmatprep.subr.mxu0 0.0
    %483 = vmatpush1.msra.mxu0 0.0
    %484 = vmatprep.subr.mxu0 0.0
    %485 = vmatpush1.msra.mxu0 0.0
    %486 = vmatprep.subr.mxu0 0.0
    %487 = vmatpush1.msra.mxu0 0.0
    %488 = vmatprep.subr.mxu0 0.0
    %489 = vmatpush1.msra.mxu0 0.0
    %490 = vmatprep.subr.mxu0 0.0
    %491 = vmatpush1.msra.mxu0 0.0
    %492 = vmatprep.subr.mxu0 0.0
    %493 = vmatpush1.msra.mxu0 0.0
    %494 = vmatprep.subr.mxu0 0.0
    %495 = vmatpush1.msra.mxu0 0.0
    %496 = vmatprep.subr.mxu0 0.0
    %497 = vmatpush1.msra.mxu0 0.0
    %498 = vmatprep.subr.mxu0 0.0
    %499 = vmatpush1.msra.mxu0 0.0
    %500 = vmatprep.subr.mxu0 0.0
    %501 = vmatpush1.msra.mxu0 0.0
    %502 = vmatprep.subr.mxu0 0.0
    %503 = vmatpush1.msra.mxu0 0.0
    %504 = vmatprep.subr.mxu0 0.0
    %505 = vmatpush1.msra.mxu0 0.0
    %506 = vmatprep.subr.mxu0 0.0
    %507 = vmatpush1.msra.mxu0 0.0
    %508 = vmatprep.subr.mxu0 0.0
    %509 = vmatpush1.msra.mxu0 0.0
    %510 = vmatprep.subr.mxu0 0.0
    %511 = vmatpush1.msra.mxu0 0.0
    %512 = vmatprep.subr.mxu0 0.0
    %513 = vmatpush1.msra.mxu0 0.0
    %514 = vmatprep.subr.mxu0 0.0
    %515 = vmatpush1.msra.mxu0 0.0
    %516 = vmatprep.subr.mxu0 0.0
    %517 = vmatpush1.msra.mxu0 0.0
    %518 = vmatprep.subr.mxu0 0.0
    %519 = vmatpush1.msra.mxu0 0.0
    %520 = vmatprep.subr.mxu0 0.0
    %521 = vmatpush1.msra.mxu0 0.0
    %522 = vmatprep.subr.mxu0 0.0
    %523 = vmatpush1.msra.mxu0 0.0
    %524 = vmatprep.subr.mxu0 0.0
    %525 = vmatpush1.msra.mxu0 0.0
    %526 = vmatprep.subr.mxu0 0.0
    %527 = vmatpush1.msra.mxu0 0.0
    %528 = vmatprep.subr.mxu0 0.0
    %529 = vmatpush1.msra.mxu0 0.0
    %530 = vmatprep.subr.mxu0 0.0
    %531 = vmatpush1.msra.mxu0 0.0
    %532 = vmatprep.subr.mxu0 0.0
    %533 = vmatpush1.msra.mxu0 0.0
    %534 = vmatprep.mubr.f32.mxu0 0.0
    %535 = vmatmul.mubr.f32.gmra.mrb[0].mxu0 %v465
    %v536 = vpop.f32.mrb[0].mxu0
    %v537 = vadd.f32 0.0, %v536
    %v538 = vpop.f32.mrb[0].mxu0
    %539 = vmatprep.mubr.f32.mxu0 0.0
    %540 = vmatmul.mubr.f32.gmra.mrb[0].mxu0 %v468
    %v541 = vpop.f32.mrb[0].mxu0
    %v542 = vadd.f32 0.0, %v541
    %v543 = vpop.f32.mrb[0].mxu0
    %544 = vdwg.mxu0
    %v545 = vadd.f32 %v133, %v537
    %v546 = vadd.f32 %v134, %v542
    %547 = vrot.lane.b32.xlu0 %v116, 120
    %v548 = vpop.permute.xlu0 %547
    %549 = vrot.lane.b32.xlu0 %v116, 88
    %v550 = vpop.permute.xlu0 %549
    %v551 = vsel %vm138, %v548, 0
    %v553 = vsel %vm138, %v550, 0
    %555 = vmatprep.subr.mxu0 0.0
    %556 = vmatpush1.xpose.msra.mxu0 %v553
    %557 = vmatprep.subr.mxu0 0.0
    %558 = vmatpush1.xpose.msra.mxu0 0.0
    %559 = vmatprep.subr.mxu0 0.0
    %560 = vmatpush1.xpose.msra.mxu0 0.0
    %561 = vmatprep.subr.mxu0 0.0
    %562 = vmatpush1.xpose.msra.mxu0 0.0
    %563 = vmatprep.subr.mxu0 0.0
    %564 = vmatpush1.xpose.msra.mxu0 0.0
    %565 = vmatprep.subr.mxu0 0.0
    %566 = vmatpush1.xpose.msra.mxu0 0.0
    %567 = vmatprep.subr.mxu0 0.0
    %568 = vmatpush1.xpose.msra.mxu0 0.0
    %569 = vmatprep.subr.mxu0 0.0
    %570 = vmatpush1.xpose.msra.mxu0 0.0
    %571 = vmatprep.subr.mxu0 0.0
    %572 = vmatpush1.xpose.msra.mxu0 0.0
    %573 = vmatprep.subr.mxu0 0.0
    %574 = vmatpush1.xpose.msra.mxu0 0.0
    %575 = vmatprep.subr.mxu0 0.0
    %576 = vmatpush1.xpose.msra.mxu0 0.0
    %577 = vmatprep.subr.mxu0 0.0
    %578 = vmatpush1.xpose.msra.mxu0 0.0
    %579 = vmatprep.subr.mxu0 0.0
    %580 = vmatpush1.xpose.msra.mxu0 0.0
    %581 = vmatprep.subr.mxu0 0.0
    %582 = vmatpush1.xpose.msra.mxu0 0.0
    %583 = vmatprep.subr.mxu0 0.0
    %584 = vmatpush1.xpose.msra.mxu0 0.0
    %585 = vmatprep.subr.mxu0 0.0
    %586 = vmatpush1.xpose.msra.mxu0 0.0
    %587 = vmatprep.subr.mxu0 0.0
    %588 = vmatpush1.xpose.msra.mxu0 0.0
    %589 = vmatprep.subr.mxu0 0.0
    %590 = vmatpush1.xpose.msra.mxu0 0.0
    %591 = vmatprep.subr.mxu0 0.0
    %592 = vmatpush1.xpose.msra.mxu0 0.0
    %593 = vmatprep.subr.mxu0 0.0
    %594 = vmatpush1.xpose.msra.mxu0 0.0
    %595 = vmatprep.subr.mxu0 0.0
    %596 = vmatpush1.xpose.msra.mxu0 0.0
    %597 = vmatprep.subr.mxu0 0.0
    %598 = vmatpush1.xpose.msra.mxu0 0.0
    %599 = vmatprep.subr.mxu0 0.0
    %600 = vmatpush1.xpose.msra.mxu0 0.0
    %601 = vmatprep.subr.mxu0 0.0
    %602 = vmatpush1.xpose.msra.mxu0 0.0
    %603 = vmatprep.subr.mxu0 0.0
    %604 = vmatpush1.xpose.msra.mxu0 0.0
    %605 = vmatprep.subr.mxu0 0.0
    %606 = vmatpush1.xpose.msra.mxu0 0.0
    %607 = vmatprep.subr.mxu0 0.0
    %608 = vmatpush1.xpose.msra.mxu0 0.0
    %609 = vmatprep.subr.mxu0 0.0
    %610 = vmatpush1.xpose.msra.mxu0 0.0
    %611 = vmatprep.subr.mxu0 0.0
    %612 = vmatpush1.xpose.msra.mxu0 0.0
    %613 = vmatprep.subr.mxu0 0.0
    %614 = vmatpush1.xpose.msra.mxu0 0.0
    %615 = vmatprep.subr.mxu0 0.0
    %616 = vmatpush1.xpose.msra.mxu0 0.0
    %617 = vmatprep.subr.mxu0 0.0
    %618 = vmatpush1.xpose.msra.mxu0 0.0
    %619 = vmatprep.mubr.f32.mxu0 0.0
    %620 = vmatmul.mubr.f32.gmra.mrb[0].mxu0 %v551
    %v621 = vpop.f32.mrb[0].mxu0
    %v622 = vadd.f32 %v31, %v621
    %v623 = vpop.f32.mrb[0].mxu0
    %624 = vdwg.mxu0
    %625 = vrot.lane.b32.xlu0 %v121, 120
    %v626 = vpop.permute.xlu0 %625
    %627 = vrot.lane.b32.xlu0 %v121, 88
    %v628 = vpop.permute.xlu0 %627
    %v629 = vsel %vm138, %v626, 0
    %v631 = vsel %vm138, %v628, 0
    %633 = vmatprep.subr.mxu0 0.0
    %634 = vmatpush1.xpose.msra.mxu0 %v631
    %635 = vmatprep.subr.mxu0 0.0
    %636 = vmatpush1.xpose.msra.mxu0 0.0
    %637 = vmatprep.subr.mxu0 0.0
    %638 = vmatpush1.xpose.msra.mxu0 0.0
    %639 = vmatprep.subr.mxu0 0.0
    %640 = vmatpush1.xpose.msra.mxu0 0.0
    %641 = vmatprep.subr.mxu0 0.0
    %642 = vmatpush1.xpose.msra.mxu0 0.0
    %643 = vmatprep.subr.mxu0 0.0
    %644 = vmatpush1.xpose.msra.mxu0 0.0
    %645 = vmatprep.subr.mxu0 0.0
    %646 = vmatpush1.xpose.msra.mxu0 0.0
    %647 = vmatprep.subr.mxu0 0.0
    %648 = vmatpush1.xpose.msra.mxu0 0.0
    %649 = vmatprep.subr.mxu0 0.0
    %650 = vmatpush1.xpose.msra.mxu0 0.0
    %651 = vmatprep.subr.mxu0 0.0
    %652 = vmatpush1.xpose.msra.mxu0 0.0
    %653 = vmatprep.subr.mxu0 0.0
    %654 = vmatpush1.xpose.msra.mxu0 0.0
    %655 = vmatprep.subr.mxu0 0.0
    %656 = vmatpush1.xpose.msra.mxu0 0.0
    %657 = vmatprep.subr.mxu0 0.0
    %658 = vmatpush1.xpose.msra.mxu0 0.0
    %659 = vmatprep.subr.mxu0 0.0
    %660 = vmatpush1.xpose.msra.mxu0 0.0
    %661 = vmatprep.subr.mxu0 0.0
    %662 = vmatpush1.xpose.msra.mxu0 0.0
    %663 = vmatprep.subr.mxu0 0.0
    %664 = vmatpush1.xpose.msra.mxu0 0.0
    %665 = vmatprep.subr.mxu0 0.0
    %666 = vmatpush1.xpose.msra.mxu0 0.0
    %667 = vmatprep.subr.mxu0 0.0
    %668 = vmatpush1.xpose.msra.mxu0 0.0
    %669 = vmatprep.subr.mxu0 0.0
    %670 = vmatpush1.xpose.msra.mxu0 0.0
    %671 = vmatprep.subr.mxu0 0.0
    %672 = vmatpush1.xpose.msra.mxu0 0.0
    %673 = vmatprep.subr.mxu0 0.0
    %674 = vmatpush1.xpose.msra.mxu0 0.0
    %675 = vmatprep.subr.mxu0 0.0
    %676 = vmatpush1.xpose.msra.mxu0 0.0
    %677 = vmatprep.subr.mxu0 0.0
    %678 = vmatpush1.xpose.msra.mxu0 0.0
    %679 = vmatprep.subr.mxu0 0.0
    %680 = vmatpush1.xpose.msra.mxu0 0.0
    %681 = vmatprep.subr.mxu0 0.0
    %682 = vmatpush1.xpose.msra.mxu0 0.0
    %683 = vmatprep.subr.mxu0 0.0
    %684 = vmatpush1.xpose.msra.mxu0 0.0
    %685 = vmatprep.subr.mxu0 0.0
    %686 = vmatpush1.xpose.msra.mxu0 0.0
    %687 = vmatprep.subr.mxu0 0.0
    %688 = vmatpush1.xpose.msra.mxu0 0.0
    %689 = vmatprep.subr.mxu0 0.0
    %690 = vmatpush1.xpose.msra.mxu0 0.0
    %691 = vmatprep.subr.mxu0 0.0
    %692 = vmatpush1.xpose.msra.mxu0 0.0
    %693 = vmatprep.subr.mxu0 0.0
    %694 = vmatpush1.xpose.msra.mxu0 0.0
    %695 = vmatprep.subr.mxu0 0.0
    %696 = vmatpush1.xpose.msra.mxu0 0.0
    %697 = vmatprep.mubr.f32.mxu0 0.0
    %698 = vmatmul.mubr.f32.gmra.mrb[0].mxu0 %v629
    %v699 = vpop.f32.mrb[0].mxu0
    %v700 = vadd.f32 %v32, %v699
    %v701 = vpop.f32.mrb[0].mxu0
    %702 = vdwg.mxu0
    %v703 = vsel %vm138, %v622, -inf
    %704 = vmax.xlane.f32.xlu0 %v703
    %v705 = vpop.xlane.xlu0 %704
    %v706 = vsel %vm138, %v700, -inf
    %707 = vmax.xlane.f32.xlu0 %v706
    %v708 = vpop.xlane.xlu0 %707
    %v709 = vsub.f32 %v622, %v705
    %v710 = vsub.f32 %v700, %v708
    %v711 = vmul.f32 %v709, 1.442695
    %v712 = vpow.pop %v711
    %v713 = vmul.f32 %v710, 1.442695
    %v714 = vpow.pop %v713
    %v715 = vsel %vm138, %v712, 0.0
    %716 = vadd.xlane.f32.xlu0 %v715
    %v717 = vpop.xlane.xlu0 %716
    %v718 = vsel %vm138, %v714, 0.0
    %719 = vadd.xlane.f32.xlu0 %v718
    %v720 = vpop.xlane.xlu0 %719
    %v721 = vrcp.pop %v717
    %v722 = vmul.f32 %v712, %v721
    %v723 = vrcp.pop %v720
    %v724 = vmul.f32 %v714, %v723
    %725 = vrot.lane.b32.xlu0 %v116, 56
    %v726 = vpop.permute.xlu0 %725
    %v729 = vsel %vm138, %v722, 0
    %731 = vmatprep.subr.mxu0 0.0
    %732 = vmatpush1.msra.mxu0 %v726
    %733 = vmatprep.subr.mxu0 0.0
    %734 = vmatpush1.msra.mxu0 0.0
    %735 = vmatprep.subr.mxu0 0.0
    %736 = vmatpush1.msra.mxu0 0.0
    %737 = vmatprep.subr.mxu0 0.0
    %738 = vmatpush1.msra.mxu0 0.0
    %739 = vmatprep.subr.mxu0 0.0
    %740 = vmatpush1.msra.mxu0 0.0
    %741 = vmatprep.subr.mxu0 0.0
    %742 = vmatpush1.msra.mxu0 0.0
    %743 = vmatprep.subr.mxu0 0.0
    %744 = vmatpush1.msra.mxu0 0.0
    %745 = vmatprep.subr.mxu0 0.0
    %746 = vmatpush1.msra.mxu0 0.0
    %747 = vmatprep.subr.mxu0 0.0
    %748 = vmatpush1.msra.mxu0 0.0
    %749 = vmatprep.subr.mxu0 0.0
    %750 = vmatpush1.msra.mxu0 0.0
    %751 = vmatprep.subr.mxu0 0.0
    %752 = vmatpush1.msra.mxu0 0.0
    %753 = vmatprep.subr.mxu0 0.0
    %754 = vmatpush1.msra.mxu0 0.0
    %755 = vmatprep.subr.mxu0 0.0
    %756 = vmatpush1.msra.mxu0 0.0
    %757 = vmatprep.subr.mxu0 0.0
    %758 = vmatpush1.msra.mxu0 0.0
    %759 = vmatprep.subr.mxu0 0.0
    %760 = vmatpush1.msra.mxu0 0.0
    %761 = vmatprep.subr.mxu0 0.0
    %762 = vmatpush1.msra.mxu0 0.0
    %763 = vmatprep.subr.mxu0 0.0
    %764 = vmatpush1.msra.mxu0 0.0
    %765 = vmatprep.subr.mxu0 0.0
    %766 = vmatpush1.msra.mxu0 0.0
    %767 = vmatprep.subr.mxu0 0.0
    %768 = vmatpush1.msra.mxu0 0.0
    %769 = vmatprep.subr.mxu0 0.0
    %770 = vmatpush1.msra.mxu0 0.0
    %771 = vmatprep.subr.mxu0 0.0
    %772 = vmatpush1.msra.mxu0 0.0
    %773 = vmatprep.subr.mxu0 0.0
    %774 = vmatpush1.msra.mxu0 0.0
    %775 = vmatprep.subr.mxu0 0.0
    %776 = vmatpush1.msra.mxu0 0.0
    %777 = vmatprep.subr.mxu0 0.0
    %778 = vmatpush1.msra.mxu0 0.0
    %779 = vmatprep.subr.mxu0 0.0
    %780 = vmatpush1.msra.mxu0 0.0
    %781 = vmatprep.subr.mxu0 0.0
    %782 = vmatpush1.msra.mxu0 0.0
    %783 = vmatprep.subr.mxu0 0.0
    %784 = vmatpush1.msra.mxu0 0.0
    %785 = vmatprep.subr.mxu0 0.0
    %786 = vmatpush1.msra.mxu0 0.0
    %787 = vmatprep.subr.mxu0 0.0
    %788 = vmatpush1.msra.mxu0 0.0
    %789 = vmatprep.subr.mxu0 0.0
    %790 = vmatpush1.msra.mxu0 0.0
    %791 = vmatprep.subr.mxu0 0.0
    %792 = vmatpush1.msra.mxu0 0.0
    %793 = vmatprep.subr.mxu0 0.0
    %794 = vmatpush1.msra.mxu0 0.0
    %795 = vmatprep.mubr.f32.mxu0 0.0
    %796 = vmatmul.mubr.f32.gmra.mrb[0].mxu0 %v729
    %v797 = vpop.f32.mrb[0].mxu0
    %v798 = vadd.f32 0.0, %v797
    %v799 = vpop.f32.mrb[0].mxu0
    %800 = vdwg.mxu0
    %801 = vrot.lane.b32.xlu0 %v121, 56
    %v802 = vpop.permute.xlu0 %801
    %v805 = vsel %vm138, %v724, 0
    %807 = vmatprep.subr.mxu0 0.0
    %808 = vmatpush1.msra.mxu0 %v802
    %809 = vmatprep.subr.mxu0 0.0
    %810 = vmatpush1.msra.mxu0 0.0
    %811 = vmatprep.subr.mxu0 0.0
    %812 = vmatpush1.msra.mxu0 0.0
    %813 = vmatprep.subr.mxu0 0.0
    %814 = vmatpush1.msra.mxu0 0.0
    %815 = vmatprep.subr.mxu0 0.0
    %816 = vmatpush1.msra.mxu0 0.0
    %817 = vmatprep.subr.mxu0 0.0
    %818 = vmatpush1.msra.mxu0 0.0
    %819 = vmatprep.subr.mxu0 0.0
    %820 = vmatpush1.msra.mxu0 0.0
    %821 = vmatprep.subr.mxu0 0.0
    %822 = vmatpush1.msra.mxu0 0.0
    %823 = vmatprep.subr.mxu0 0.0
    %824 = vmatpush1.msra.mxu0 0.0
    %825 = vmatprep.subr.mxu0 0.0
    %826 = vmatpush1.msra.mxu0 0.0
    %827 = vmatprep.subr.mxu0 0.0
    %828 = vmatpush1.msra.mxu0 0.0
    %829 = vmatprep.subr.mxu0 0.0
    %830 = vmatpush1.msra.mxu0 0.0
    %831 = vmatprep.subr.mxu0 0.0
    %832 = vmatpush1.msra.mxu0 0.0
    %833 = vmatprep.subr.mxu0 0.0
    %834 = vmatpush1.msra.mxu0 0.0
    %835 = vmatprep.subr.mxu0 0.0
    %836 = vmatpush1.msra.mxu0 0.0
    %837 = vmatprep.subr.mxu0 0.0
    %838 = vmatpush1.msra.mxu0 0.0
    %839 = vmatprep.subr.mxu0 0.0
    %840 = vmatpush1.msra.mxu0 0.0
    %841 = vmatprep.subr.mxu0 0.0
    %842 = vmatpush1.msra.mxu0 0.0
    %843 = vmatprep.subr.mxu0 0.0
    %844 = vmatpush1.msra.mxu0 0.0
    %845 = vmatprep.subr.mxu0 0.0
    %846 = vmatpush1.msra.mxu0 0.0
    %847 = vmatprep.subr.mxu0 0.0
    %848 = vmatpush1.msra.mxu0 0.0
    %849 = vmatprep.subr.mxu0 0.0
    %850 = vmatpush1.msra.mxu0 0.0
    %851 = vmatprep.subr.mxu0 0.0
    %852 = vmatpush1.msra.mxu0 0.0
    %853 = vmatprep.subr.mxu0 0.0
    %854 = vmatpush1.msra.mxu0 0.0
    %855 = vmatprep.subr.mxu0 0.0
    %856 = vmatpush1.msra.mxu0 0.0
    %857 = vmatprep.subr.mxu0 0.0
    %858 = vmatpush1.msra.mxu0 0.0
    %859 = vmatprep.subr.mxu0 0.0
    %860 = vmatpush1.msra.mxu0 0.0
    %861 = vmatprep.subr.mxu0 0.0
    %862 = vmatpush1.msra.mxu0 0.0
    %863 = vmatprep.subr.mxu0 0.0
    %864 = vmatpush1.msra.mxu0 0.0
    %865 = vmatprep.subr.mxu0 0.0
    %866 = vmatpush1.msra.mxu0 0.0
    %867 = vmatprep.subr.mxu0 0.0
    %868 = vmatpush1.msra.mxu0 0.0
    %869 = vmatprep.subr.mxu0 0.0
    %870 = vmatpush1.msra.mxu0 0.0
    %871 = vmatprep.mubr.f32.mxu0 0.0
    %872 = vmatmul.mubr.f32.gmra.mrb[0].mxu0 %v805
    %v873 = vpop.f32.mrb[0].mxu0
    %v874 = vadd.f32 0.0, %v873
    %v875 = vpop.f32.mrb[0].mxu0
    %876 = vdwg.mxu0
    %v878 = vsel %vm138, %v798, 0
    %v881 = vsel %vm138, %v874, 0
    %883 = vmatprep.subr.mxu0 0.0
    %884 = vmatpush1.msra.mxu0 %v125
    %885 = vmatprep.subr.mxu0 0.0
    %886 = vmatpush1.msra.mxu0 0.0
    %887 = vmatprep.subr.mxu0 0.0
    %888 = vmatpush1.msra.mxu0 0.0
    %889 = vmatprep.subr.mxu0 0.0
    %890 = vmatpush1.msra.mxu0 0.0
    %891 = vmatprep.subr.mxu0 0.0
    %892 = vmatpush1.msra.mxu0 0.0
    %893 = vmatprep.subr.mxu0 0.0
    %894 = vmatpush1.msra.mxu0 0.0
    %895 = vmatprep.subr.mxu0 0.0
    %896 = vmatpush1.msra.mxu0 0.0
    %897 = vmatprep.subr.mxu0 0.0
    %898 = vmatpush1.msra.mxu0 0.0
    %899 = vmatprep.subr.mxu0 0.0
    %900 = vmatpush1.msra.mxu0 0.0
    %901 = vmatprep.subr.mxu0 0.0
    %902 = vmatpush1.msra.mxu0 0.0
    %903 = vmatprep.subr.mxu0 0.0
    %904 = vmatpush1.msra.mxu0 0.0
    %905 = vmatprep.subr.mxu0 0.0
    %906 = vmatpush1.msra.mxu0 0.0
    %907 = vmatprep.subr.mxu0 0.0
    %908 = vmatpush1.msra.mxu0 0.0
    %909 = vmatprep.subr.mxu0 0.0
    %910 = vmatpush1.msra.mxu0 0.0
    %911 = vmatprep.subr.mxu0 0.0
    %912 = vmatpush1.msra.mxu0 0.0
    %913 = vmatprep.subr.mxu0 0.0
    %914 = vmatpush1.msra.mxu0 0.0
    %915 = vmatprep.subr.mxu0 0.0
    %916 = vmatpush1.msra.mxu0 0.0
    %917 = vmatprep.subr.mxu0 0.0
    %918 = vmatpush1.msra.mxu0 0.0
    %919 = vmatprep.subr.mxu0 0.0
    %920 = vmatpush1.msra.mxu0 0.0
    %921 = vmatprep.subr.mxu0 0.0
    %922 = vmatpush1.msra.mxu0 0.0
    %923 = vmatprep.subr.mxu0 0.0
    %924 = vmatpush1.msra.mxu0 0.0
    %925 = vmatprep.subr.mxu0 0.0
    %926 = vmatpush1.msra.mxu0 0.0
    %927 = vmatprep.subr.mxu0 0.0
    %928 = vmatpush1.msra.mxu0 0.0
    %929 = vmatprep.subr.mxu0 0.0
    %930 = vmatpush1.msra.mxu0 0.0
    %931 = vmatprep.subr.mxu0 0.0
    %932 = vmatpush1.msra.mxu0 0.0
    %933 = vmatprep.subr.mxu0 0.0
    %934 = vmatpush1.msra.mxu0 0.0
    %935 = vmatprep.subr.mxu0 0.0
    %936 = vmatpush1.msra.mxu0 0.0
    %937 = vmatprep.subr.mxu0 0.0
    %938 = vmatpush1.msra.mxu0 0.0
    %939 = vmatprep.subr.mxu0 0.0
    %940 = vmatpush1.msra.mxu0 0.0
    %941 = vmatprep.subr.mxu0 0.0
    %942 = vmatpush1.msra.mxu0 0.0
    %943 = vmatprep.subr.mxu0 0.0
    %944 = vmatpush1.msra.mxu0 0.0
    %945 = vmatprep.subr.mxu0 0.0
    %946 = vmatpush1.msra.mxu0 0.0
    %947 = vmatprep.mubr.f32.mxu0 0.0
    %948 = vmatmul.mubr.f32.gmra.mrb[0].mxu0 %v878
    %v949 = vpop.f32.mrb[0].mxu0
    %v950 = vadd.f32 0.0, %v949
    %v951 = vpop.f32.mrb[0].mxu0
    %952 = vmatprep.mubr.f32.mxu0 0.0
    %953 = vmatmul.mubr.f32.gmra.mrb[0].mxu0 %v881
    %v954 = vpop.f32.mrb[0].mxu0
    %v955 = vadd.f32 0.0, %v954
    %v956 = vpop.f32.mrb[0].mxu0
    %957 = vdwg.mxu0
    %v958 = vadd.f32 %v545, %v950
    %v959 = vadd.f32 %v546, %v955
    %960 = vrot.lane.b32.xlu0 %v116, 112
    %v961 = vpop.permute.xlu0 %960
    %962 = vrot.lane.b32.xlu0 %v116, 80
    %v963 = vpop.permute.xlu0 %962
    %v964 = vsel %vm138, %v961, 0
    %v966 = vsel %vm138, %v963, 0
    %968 = vmatprep.subr.mxu0 0.0
    %969 = vmatpush1.xpose.msra.mxu0 %v966
    %970 = vmatprep.subr.mxu0 0.0
    %971 = vmatpush1.xpose.msra.mxu0 0.0
    %972 = vmatprep.subr.mxu0 0.0
    %973 = vmatpush1.xpose.msra.mxu0 0.0
    %974 = vmatprep.subr.mxu0 0.0
    %975 = vmatpush1.xpose.msra.mxu0 0.0
    %976 = vmatprep.subr.mxu0 0.0
    %977 = vmatpush1.xpose.msra.mxu0 0.0
    %978 = vmatprep.subr.mxu0 0.0
    %979 = vmatpush1.xpose.msra.mxu0 0.0
    %980 = vmatprep.subr.mxu0 0.0
    %981 = vmatpush1.xpose.msra.mxu0 0.0
    %982 = vmatprep.subr.mxu0 0.0
    %983 = vmatpush1.xpose.msra.mxu0 0.0
    %984 = vmatprep.subr.mxu0 0.0
    %985 = vmatpush1.xpose.msra.mxu0 0.0
    %986 = vmatprep.subr.mxu0 0.0
    %987 = vmatpush1.xpose.msra.mxu0 0.0
    %988 = vmatprep.subr.mxu0 0.0
    %989 = vmatpush1.xpose.msra.mxu0 0.0
    %990 = vmatprep.subr.mxu0 0.0
    %991 = vmatpush1.xpose.msra.mxu0 0.0
    %992 = vmatprep.subr.mxu0 0.0
    %993 = vmatpush1.xpose.msra.mxu0 0.0
    %994 = vmatprep.subr.mxu0 0.0
    %995 = vmatpush1.xpose.msra.mxu0 0.0
    %996 = vmatprep.subr.mxu0 0.0
    %997 = vmatpush1.xpose.msra.mxu0 0.0
    %998 = vmatprep.subr.mxu0 0.0
    %999 = vmatpush1.xpose.msra.mxu0 0.0
    %1000 = vmatprep.subr.mxu0 0.0
    %1001 = vmatpush1.xpose.msra.mxu0 0.0
    %1002 = vmatprep.subr.mxu0 0.0
    %1003 = vmatpush1.xpose.msra.mxu0 0.0
    %1004 = vmatprep.subr.mxu0 0.0
    %1005 = vmatpush1.xpose.msra.mxu0 0.0
    %1006 = vmatprep.subr.mxu0 0.0
    %1007 = vmatpush1.xpose.msra.mxu0 0.0
    %1008 = vmatprep.subr.mxu0 0.0
    %1009 = vmatpush1.xpose.msra.mxu0 0.0
    %1010 = vmatprep.subr.mxu0 0.0
    %1011 = vmatpush1.xpose.msra.mxu0 0.0
    %1012 = vmatprep.subr.mxu0 0.0
    %1013 = vmatpush1.xpose.msra.mxu0 0.0
    %1014 = vmatprep.subr.mxu0 0.0
    %1015 = vmatpush1.xpose.msra.mxu0 0.0
    %1016 = vmatprep.subr.mxu0 0.0
    %1017 = vmatpush1.xpose.msra.mxu0 0.0
    %1018 = vmatprep.subr.mxu0 0.0
    %1019 = vmatpush1.xpose.msra.mxu0 0.0
    %1020 = vmatprep.subr.mxu0 0.0
    %1021 = vmatpush1.xpose.msra.mxu0 0.0
    %1022 = vmatprep.subr.mxu0 0.0
    %1023 = vmatpush1.xpose.msra.mxu0 0.0
    %1024 = vmatprep.subr.mxu0 0.0
    %1025 = vmatpush1.xpose.msra.mxu0 0.0
    %1026 = vmatprep.subr.mxu0 0.0
    %1027 = vmatpush1.xpose.msra.mxu0 0.0
    %1028 = vmatprep.subr.mxu0 0.0
    %1029 = vmatpush1.xpose.msra.mxu0 0.0
    %1030 = vmatprep.subr.mxu0 0.0
    %1031 = vmatpush1.xpose.msra.mxu0 0.0
    %1032 = vmatprep.mubr.f32.mxu0 0.0
    %1033 = vmatmul.mubr.f32.gmra.mrb[0].mxu0 %v964
    %v1034 = vpop.f32.mrb[0].mxu0
    %v1035 = vadd.f32 %v31, %v1034
    %v1036 = vpop.f32.mrb[0].mxu0
    %1037 = vdwg.mxu0
    %1038 = vrot.lane.b32.xlu0 %v121, 112
    %v1039 = vpop.permute.xlu0 %1038
    %1040 = vrot.lane.b32.xlu0 %v121, 80
    %v1041 = vpop.permute.xlu0 %1040
    %v1042 = vsel %vm138, %v1039, 0
    %v1044 = vsel %vm138, %v1041, 0
    %1046 = vmatprep.subr.mxu0 0.0
    %1047 = vmatpush1.xpose.msra.mxu0 %v1044
    %1048 = vmatprep.subr.mxu0 0.0
    %1049 = vmatpush1.xpose.msra.mxu0 0.0
    %1050 = vmatprep.subr.mxu0 0.0
    %1051 = vmatpush1.xpose.msra.mxu0 0.0
    %1052 = vmatprep.subr.mxu0 0.0
    %1053 = vmatpush1.xpose.msra.mxu0 0.0
    %1054 = vmatprep.subr.mxu0 0.0
    %1055 = vmatpush1.xpose.msra.mxu0 0.0
    %1056 = vmatprep.subr.mxu0 0.0
    %1057 = vmatpush1.xpose.msra.mxu0 0.0
    %1058 = vmatprep.subr.mxu0 0.0
    %1059 = vmatpush1.xpose.msra.mxu0 0.0
    %1060 = vmatprep.subr.mxu0 0.0
    %1061 = vmatpush1.xpose.msra.mxu0 0.0
    %1062 = vmatprep.subr.mxu0 0.0
    %1063 = vmatpush1.xpose.msra.mxu0 0.0
    %1064 = vmatprep.subr.mxu0 0.0
    %1065 = vmatpush1.xpose.msra.mxu0 0.0
    %1066 = vmatprep.subr.mxu0 0.0
    %1067 = vmatpush1.xpose.msra.mxu0 0.0
    %1068 = vmatprep.subr.mxu0 0.0
    %1069 = vmatpush1.xpose.msra.mxu0 0.0
    %1070 = vmatprep.subr.mxu0 0.0
    %1071 = vmatpush1.xpose.msra.mxu0 0.0
    %1072 = vmatprep.subr.mxu0 0.0
    %1073 = vmatpush1.xpose.msra.mxu0 0.0
    %1074 = vmatprep.subr.mxu0 0.0
    %1075 = vmatpush1.xpose.msra.mxu0 0.0
    %1076 = vmatprep.subr.mxu0 0.0
    %1077 = vmatpush1.xpose.msra.mxu0 0.0
    %1078 = vmatprep.subr.mxu0 0.0
    %1079 = vmatpush1.xpose.msra.mxu0 0.0
    %1080 = vmatprep.subr.mxu0 0.0
    %1081 = vmatpush1.xpose.msra.mxu0 0.0
    %1082 = vmatprep.subr.mxu0 0.0
    %1083 = vmatpush1.xpose.msra.mxu0 0.0
    %1084 = vmatprep.subr.mxu0 0.0
    %1085 = vmatpush1.xpose.msra.mxu0 0.0
    %1086 = vmatprep.subr.mxu0 0.0
    %1087 = vmatpush1.xpose.msra.mxu0 0.0
    %1088 = vmatprep.subr.mxu0 0.0
    %1089 = vmatpush1.xpose.msra.mxu0 0.0
    %1090 = vmatprep.subr.mxu0 0.0
    %1091 = vmatpush1.xpose.msra.mxu0 0.0
    %1092 = vmatprep.subr.mxu0 0.0
    %1093 = vmatpush1.xpose.msra.mxu0 0.0
    %1094 = vmatprep.subr.mxu0 0.0
    %1095 = vmatpush1.xpose.msra.mxu0 0.0
    %1096 = vmatprep.subr.mxu0 0.0
    %1097 = vmatpush1.xpose.msra.mxu0 0.0
    %1098 = vmatprep.subr.mxu0 0.0
    %1099 = vmatpush1.xpose.msra.mxu0 0.0
    %1100 = vmatprep.subr.mxu0 0.0
    %1101 = vmatpush1.xpose.msra.mxu0 0.0
    %1102 = vmatprep.subr.mxu0 0.0
    %1103 = vmatpush1.xpose.msra.mxu0 0.0
    %1104 = vmatprep.subr.mxu0 0.0
    %1105 = vmatpush1.xpose.msra.mxu0 0.0
    %1106 = vmatprep.subr.mxu0 0.0
    %1107 = vmatpush1.xpose.msra.mxu0 0.0
    %1108 = vmatprep.subr.mxu0 0.0
    %1109 = vmatpush1.xpose.msra.mxu0 0.0
    %1110 = vmatprep.mubr.f32.mxu0 0.0
    %1111 = vmatmul.mubr.f32.gmra.mrb[0].mxu0 %v1042
    %v1112 = vpop.f32.mrb[0].mxu0
    %v1113 = vadd.f32 %v32, %v1112
    %v1114 = vpop.f32.mrb[0].mxu0
    %1115 = vdwg.mxu0
    %v1116 = vsel %vm138, %v1035, -inf
    %1117 = vmax.xlane.f32.xlu0 %v1116
    %v1118 = vpop.xlane.xlu0 %1117
    %v1119 = vsel %vm138, %v1113, -inf
    %1120 = vmax.xlane.f32.xlu0 %v1119
    %v1121 = vpop.xlane.xlu0 %1120
    %v1122 = vsub.f32 %v1035, %v1118
    %v1123 = vsub.f32 %v1113, %v1121
    %v1124 = vmul.f32 %v1122, 1.442695
    %v1125 = vpow.pop %v1124
    %v1126 = vmul.f32 %v1123, 1.442695
    %v1127 = vpow.pop %v1126
    %v1128 = vsel %vm138, %v1125, 0.0
    %1129 = vadd.xlane.f32.xlu0 %v1128
    %v1130 = vpop.xlane.xlu0 %1129
    %v1131 = vsel %vm138, %v1127, 0.0
    %1132 = vadd.xlane.f32.xlu0 %v1131
    %v1133 = vpop.xlane.xlu0 %1132
    %v1134 = vrcp.pop %v1130
    %v1135 = vmul.f32 %v1125, %v1134
    %v1136 = vrcp.pop %v1133
    %v1137 = vmul.f32 %v1127, %v1136
    %1138 = vrot.lane.b32.xlu0 %v116, 48
    %v1139 = vpop.permute.xlu0 %1138
    %v1142 = vsel %vm138, %v1135, 0
    %1144 = vmatprep.subr.mxu0 0.0
    %1145 = vmatpush1.msra.mxu0 %v1139
    %1146 = vmatprep.subr.mxu0 0.0
    %1147 = vmatpush1.msra.mxu0 0.0
    %1148 = vmatprep.subr.mxu0 0.0
    %1149 = vmatpush1.msra.mxu0 0.0
    %1150 = vmatprep.subr.mxu0 0.0
    %1151 = vmatpush1.msra.mxu0 0.0
    %1152 = vmatprep.subr.mxu0 0.0
    %1153 = vmatpush1.msra.mxu0 0.0
    %1154 = vmatprep.subr.mxu0 0.0
    %1155 = vmatpush1.msra.mxu0 0.0
    %1156 = vmatprep.subr.mxu0 0.0
    %1157 = vmatpush1.msra.mxu0 0.0
    %1158 = vmatprep.subr.mxu0 0.0
    %1159 = vmatpush1.msra.mxu0 0.0
    %1160 = vmatprep.subr.mxu0 0.0
    %1161 = vmatpush1.msra.mxu0 0.0
    %1162 = vmatprep.subr.mxu0 0.0
    %1163 = vmatpush1.msra.mxu0 0.0
    %1164 = vmatprep.subr.mxu0 0.0
    %1165 = vmatpush1.msra.mxu0 0.0
    %1166 = vmatprep.subr.mxu0 0.0
    %1167 = vmatpush1.msra.mxu0 0.0
    %1168 = vmatprep.subr.mxu0 0.0
    %1169 = vmatpush1.msra.mxu0 0.0
    %1170 = vmatprep.subr.mxu0 0.0
    %1171 = vmatpush1.msra.mxu0 0.0
    %1172 = vmatprep.subr.mxu0 0.0
    %1173 = vmatpush1.msra.mxu0 0.0
    %1174 = vmatprep.subr.mxu0 0.0
    %1175 = vmatpush1.msra.mxu0 0.0
    %1176 = vmatprep.subr.mxu0 0.0
    %1177 = vmatpush1.msra.mxu0 0.0
    %1178 = vmatprep.subr.mxu0 0.0
    %1179 = vmatpush1.msra.mxu0 0.0
    %1180 = vmatprep.subr.mxu0 0.0
    %1181 = vmatpush1.msra.mxu0 0.0
    %1182 = vmatprep.subr.mxu0 0.0
    %1183 = vmatpush1.msra.mxu0 0.0
    %1184 = vmatprep.subr.mxu0 0.0
    %1185 = vmatpush1.msra.mxu0 0.0
    %1186 = vmatprep.subr.mxu0 0.0
    %1187 = vmatpush1.msra.mxu0 0.0
    %1188 = vmatprep.subr.mxu0 0.0
    %1189 = vmatpush1.msra.mxu0 0.0
    %1190 = vmatprep.subr.mxu0 0.0
    %1191 = vmatpush1.msra.mxu0 0.0
    %1192 = vmatprep.subr.mxu0 0.0
    %1193 = vmatpush1.msra.mxu0 0.0
    %1194 = vmatprep.subr.mxu0 0.0
    %1195 = vmatpush1.msra.mxu0 0.0
    %1196 = vmatprep.subr.mxu0 0.0
    %1197 = vmatpush1.msra.mxu0 0.0
    %1198 = vmatprep.subr.mxu0 0.0
    %1199 = vmatpush1.msra.mxu0 0.0
    %1200 = vmatprep.subr.mxu0 0.0
    %1201 = vmatpush1.msra.mxu0 0.0
    %1202 = vmatprep.subr.mxu0 0.0
    %1203 = vmatpush1.msra.mxu0 0.0
    %1204 = vmatprep.subr.mxu0 0.0
    %1205 = vmatpush1.msra.mxu0 0.0
    %1206 = vmatprep.subr.mxu0 0.0
    %1207 = vmatpush1.msra.mxu0 0.0
    %1208 = vmatprep.mubr.f32.mxu0 0.0
    %1209 = vmatmul.mubr.f32.gmra.mrb[0].mxu0 %v1142
    %v1210 = vpop.f32.mrb[0].mxu0
    %v1211 = vadd.f32 0.0, %v1210
    %v1212 = vpop.f32.mrb[0].mxu0
    %1213 = vdwg.mxu0
    %1214 = vrot.lane.b32.xlu0 %v121, 48
    %v1215 = vpop.permute.xlu0 %1214
    %v1218 = vsel %vm138, %v1137, 0
    %1220 = vmatprep.subr.mxu0 0.0
    %1221 = vmatpush1.msra.mxu0 %v1215
    %1222 = vmatprep.subr.mxu0 0.0
    %1223 = vmatpush1.msra.mxu0 0.0
    %1224 = vmatprep.subr.mxu0 0.0
    %1225 = vmatpush1.msra.mxu0 0.0
    %1226 = vmatprep.subr.mxu0 0.0
    %1227 = vmatpush1.msra.mxu0 0.0
    %1228 = vmatprep.subr.mxu0 0.0
    %1229 = vmatpush1.msra.mxu0 0.0
    %1230 = vmatprep.subr.mxu0 0.0
    %1231 = vmatpush1.msra.mxu0 0.0
    %1232 = vmatprep.subr.mxu0 0.0
    %1233 = vmatpush1.msra.mxu0 0.0
    %1234 = vmatprep.subr.mxu0 0.0
    %1235 = vmatpush1.msra.mxu0 0.0
    %1236 = vmatprep.subr.mxu0 0.0
    %1237 = vmatpush1.msra.mxu0 0.0
    %1238 = vmatprep.subr.mxu0 0.0
    %1239 = vmatpush1.msra.mxu0 0.0
    %1240 = vmatprep.subr.mxu0 0.0
    %1241 = vmatpush1.msra.mxu0 0.0
    %1242 = vmatprep.subr.mxu0 0.0
    %1243 = vmatpush1.msra.mxu0 0.0
    %1244 = vmatprep.subr.mxu0 0.0
    %1245 = vmatpush1.msra.mxu0 0.0
    %1246 = vmatprep.subr.mxu0 0.0
    %1247 = vmatpush1.msra.mxu0 0.0
    %1248 = vmatprep.subr.mxu0 0.0
    %1249 = vmatpush1.msra.mxu0 0.0
    %1250 = vmatprep.subr.mxu0 0.0
    %1251 = vmatpush1.msra.mxu0 0.0
    %1252 = vmatprep.subr.mxu0 0.0
    %1253 = vmatpush1.msra.mxu0 0.0
    %1254 = vmatprep.subr.mxu0 0.0
    %1255 = vmatpush1.msra.mxu0 0.0
    %1256 = vmatprep.subr.mxu0 0.0
    %1257 = vmatpush1.msra.mxu0 0.0
    %1258 = vmatprep.subr.mxu0 0.0
    %1259 = vmatpush1.msra.mxu0 0.0
    %1260 = vmatprep.subr.mxu0 0.0
    %1261 = vmatpush1.msra.mxu0 0.0
    %1262 = vmatprep.subr.mxu0 0.0
    %1263 = vmatpush1.msra.mxu0 0.0
    %1264 = vmatprep.subr.mxu0 0.0
    %1265 = vmatpush1.msra.mxu0 0.0
    %1266 = vmatprep.subr.mxu0 0.0
    %1267 = vmatpush1.msra.mxu0 0.0
    %1268 = vmatprep.subr.mxu0 0.0
    %1269 = vmatpush1.msra.mxu0 0.0
    %1270 = vmatprep.subr.mxu0 0.0
    %1271 = vmatpush1.msra.mxu0 0.0
    %1272 = vmatprep.subr.mxu0 0.0
    %1273 = vmatpush1.msra.mxu0 0.0
    %1274 = vmatprep.subr.mxu0 0.0
    %1275 = vmatpush1.msra.mxu0 0.0
    %1276 = vmatprep.subr.mxu0 0.0
    %1277 = vmatpush1.msra.mxu0 0.0
    %1278 = vmatprep.subr.mxu0 0.0
    %1279 = vmatpush1.msra.mxu0 0.0
    %1280 = vmatprep.subr.mxu0 0.0
    %1281 = vmatpush1.msra.mxu0 0.0
    %1282 = vmatprep.subr.mxu0 0.0
    %1283 = vmatpush1.msra.mxu0 0.0
    %1284 = vmatprep.mubr.f32.mxu0 0.0
    %1285 = vmatmul.mubr.f32.gmra.mrb[0].mxu0 %v1218
    %v1286 = vpop.f32.mrb[0].mxu0
    %v1287 = vadd.f32 0.0, %v1286
    %v1288 = vpop.f32.mrb[0].mxu0
    %1289 = vdwg.mxu0
    %v1291 = vsel %vm138, %v1211, 0
    %v1294 = vsel %vm138, %v1287, 0
    %1296 = vmatprep.subr.mxu0 0.0
    %1297 = vmatpush1.msra.mxu0 %v126
    %1298 = vmatprep.subr.mxu0 0.0
    %1299 = vmatpush1.msra.mxu0 0.0
    %1300 = vmatprep.subr.mxu0 0.0
    %1301 = vmatpush1.msra.mxu0 0.0
    %1302 = vmatprep.subr.mxu0 0.0
    %1303 = vmatpush1.msra.mxu0 0.0
    %1304 = vmatprep.subr.mxu0 0.0
    %1305 = vmatpush1.msra.mxu0 0.0
    %1306 = vmatprep.subr.mxu0 0.0
    %1307 = vmatpush1.msra.mxu0 0.0
    %1308 = vmatprep.subr.mxu0 0.0
    %1309 = vmatpush1.msra.mxu0 0.0
    %1310 = vmatprep.subr.mxu0 0.0
    %1311 = vmatpush1.msra.mxu0 0.0
    %1312 = vmatprep.subr.mxu0 0.0
    %1313 = vmatpush1.msra.mxu0 0.0
    %1314 = vmatprep.subr.mxu0 0.0
    %1315 = vmatpush1.msra.mxu0 0.0
    %1316 = vmatprep.subr.mxu0 0.0
    %1317 = vmatpush1.msra.mxu0 0.0
    %1318 = vmatprep.subr.mxu0 0.0
    %1319 = vmatpush1.msra.mxu0 0.0
    %1320 = vmatprep.subr.mxu0 0.0
    %1321 = vmatpush1.msra.mxu0 0.0
    %1322 = vmatprep.subr.mxu0 0.0
    %1323 = vmatpush1.msra.mxu0 0.0
    %1324 = vmatprep.subr.mxu0 0.0
    %1325 = vmatpush1.msra.mxu0 0.0
    %1326 = vmatprep.subr.mxu0 0.0
    %1327 = vmatpush1.msra.mxu0 0.0
    %1328 = vmatprep.subr.mxu0 0.0
    %1329 = vmatpush1.msra.mxu0 0.0
    %1330 = vmatprep.subr.mxu0 0.0
    %1331 = vmatpush1.msra.mxu0 0.0
    %1332 = vmatprep.subr.mxu0 0.0
    %1333 = vmatpush1.msra.mxu0 0.0
    %1334 = vmatprep.subr.mxu0 0.0
    %1335 = vmatpush1.msra.mxu0 0.0
    %1336 = vmatprep.subr.mxu0 0.0
    %1337 = vmatpush1.msra.mxu0 0.0
    %1338 = vmatprep.subr.mxu0 0.0
    %1339 = vmatpush1.msra.mxu0 0.0
    %1340 = vmatprep.subr.mxu0 0.0
    %1341 = vmatpush1.msra.mxu0 0.0
    %1342 = vmatprep.subr.mxu0 0.0
    %1343 = vmatpush1.msra.mxu0 0.0
    %1344 = vmatprep.subr.mxu0 0.0
    %1345 = vmatpush1.msra.mxu0 0.0
    %1346 = vmatprep.subr.mxu0 0.0
    %1347 = vmatpush1.msra.mxu0 0.0
    %1348 = vmatprep.subr.mxu0 0.0
    %1349 = vmatpush1.msra.mxu0 0.0
    %1350 = vmatprep.subr.mxu0 0.0
    %1351 = vmatpush1.msra.mxu0 0.0
    %1352 = vmatprep.subr.mxu0 0.0
    %1353 = vmatpush1.msra.mxu0 0.0
    %1354 = vmatprep.subr.mxu0 0.0
    %1355 = vmatpush1.msra.mxu0 0.0
    %1356 = vmatprep.subr.mxu0 0.0
    %1357 = vmatpush1.msra.mxu0 0.0
    %1358 = vmatprep.subr.mxu0 0.0
    %1359 = vmatpush1.msra.mxu0 0.0
    %1360 = vmatprep.mubr.f32.mxu0 0.0
    %1361 = vmatmul.mubr.f32.gmra.mrb[0].mxu0 %v1291
    %v1362 = vpop.f32.mrb[0].mxu0
    %v1363 = vadd.f32 0.0, %v1362
    %v1364 = vpop.f32.mrb[0].mxu0
    %1365 = vmatprep.mubr.f32.mxu0 0.0
    %1366 = vmatmul.mubr.f32.gmra.mrb[0].mxu0 %v1294
    %v1367 = vpop.f32.mrb[0].mxu0
    %v1368 = vadd.f32 0.0, %v1367
    %v1369 = vpop.f32.mrb[0].mxu0
    %1370 = vdwg.mxu0
    %v1371 = vadd.f32 %v958, %v1363
    %v1372 = vadd.f32 %v959, %v1368
    %1373 = vrot.lane.b32.xlu0 %v116, 104
    %v1374 = vpop.permute.xlu0 %1373
    %1375 = vrot.lane.b32.xlu0 %v116, 72
    %v1376 = vpop.permute.xlu0 %1375
    %v1377 = vsel %vm138, %v1374, 0
    %v1379 = vsel %vm138, %v1376, 0
    %1381 = vmatprep.subr.mxu0 0.0
    %1382 = vmatpush1.xpose.msra.mxu0 %v1379
    %1383 = vmatprep.subr.mxu0 0.0
    %1384 = vmatpush1.xpose.msra.mxu0 0.0
    %1385 = vmatprep.subr.mxu0 0.0
    %1386 = vmatpush1.xpose.msra.mxu0 0.0
    %1387 = vmatprep.subr.mxu0 0.0
    %1388 = vmatpush1.xpose.msra.mxu0 0.0
    %1389 = vmatprep.subr.mxu0 0.0
    %1390 = vmatpush1.xpose.msra.mxu0 0.0
    %1391 = vmatprep.subr.mxu0 0.0
    %1392 = vmatpush1.xpose.msra.mxu0 0.0
    %1393 = vmatprep.subr.mxu0 0.0
    %1394 = vmatpush1.xpose.msra.mxu0 0.0
    %1395 = vmatprep.subr.mxu0 0.0
    %1396 = vmatpush1.xpose.msra.mxu0 0.0
    %1397 = vmatprep.subr.mxu0 0.0
    %1398 = vmatpush1.xpose.msra.mxu0 0.0
    %1399 = vmatprep.subr.mxu0 0.0
    %1400 = vmatpush1.xpose.msra.mxu0 0.0
    %1401 = vmatprep.subr.mxu0 0.0
    %1402 = vmatpush1.xpose.msra.mxu0 0.0
    %1403 = vmatprep.subr.mxu0 0.0
    %1404 = vmatpush1.xpose.msra.mxu0 0.0
    %1405 = vmatprep.subr.mxu0 0.0
    %1406 = vmatpush1.xpose.msra.mxu0 0.0
    %1407 = vmatprep.subr.mxu0 0.0
    %1408 = vmatpush1.xpose.msra.mxu0 0.0
    %1409 = vmatprep.subr.mxu0 0.0
    %1410 = vmatpush1.xpose.msra.mxu0 0.0
    %1411 = vmatprep.subr.mxu0 0.0
    %1412 = vmatpush1.xpose.msra.mxu0 0.0
    %1413 = vmatprep.subr.mxu0 0.0
    %1414 = vmatpush1.xpose.msra.mxu0 0.0
    %1415 = vmatprep.subr.mxu0 0.0
    %1416 = vmatpush1.xpose.msra.mxu0 0.0
    %1417 = vmatprep.subr.mxu0 0.0
    %1418 = vmatpush1.xpose.msra.mxu0 0.0
    %1419 = vmatprep.subr.mxu0 0.0
    %1420 = vmatpush1.xpose.msra.mxu0 0.0
    %1421 = vmatprep.subr.mxu0 0.0
    %1422 = vmatpush1.xpose.msra.mxu0 0.0
    %1423 = vmatprep.subr.mxu0 0.0
    %1424 = vmatpush1.xpose.msra.mxu0 0.0
    %1425 = vmatprep.subr.mxu0 0.0
    %1426 = vmatpush1.xpose.msra.mxu0 0.0
    %1427 = vmatprep.subr.mxu0 0.0
    %1428 = vmatpush1.xpose.msra.mxu0 0.0
    %1429 = vmatprep.subr.mxu0 0.0
    %1430 = vmatpush1.xpose.msra.mxu0 0.0
    %1431 = vmatprep.subr.mxu0 0.0
    %1432 = vmatpush1.xpose.msra.mxu0 0.0
    %1433 = vmatprep.subr.mxu0 0.0
    %1434 = vmatpush1.xpose.msra.mxu0 0.0
    %1435 = vmatprep.subr.mxu0 0.0
    %1436 = vmatpush1.xpose.msra.mxu0 0.0
    %1437 = vmatprep.subr.mxu0 0.0
    %1438 = vmatpush1.xpose.msra.mxu0 0.0
    %1439 = vmatprep.subr.mxu0 0.0
    %1440 = vmatpush1.xpose.msra.mxu0 0.0
    %1441 = vmatprep.subr.mxu0 0.0
    %1442 = vmatpush1.xpose.msra.mxu0 0.0
    %1443 = vmatprep.subr.mxu0 0.0
    %1444 = vmatpush1.xpose.msra.mxu0 0.0
    %1445 = vmatprep.mubr.f32.mxu0 0.0
    %1446 = vmatmul.mubr.f32.gmra.mrb[0].mxu0 %v1377
    %v1447 = vpop.f32.mrb[0].mxu0
    %v1448 = vadd.f32 %v31, %v1447
    %v1449 = vpop.f32.mrb[0].mxu0
    %1450 = vdwg.mxu0
    %1451 = vrot.lane.b32.xlu0 %v121, 104
    %v1452 = vpop.permute.xlu0 %1451
    %1453 = vrot.lane.b32.xlu0 %v121, 72
    %v1454 = vpop.permute.xlu0 %1453
    %v1455 = vsel %vm138, %v1452, 0
    %v1457 = vsel %vm138, %v1454, 0
    %1459 = vmatprep.subr.mxu0 0.0
    %1460 = vmatpush1.xpose.msra.mxu0 %v1457
    %1461 = vmatprep.subr.mxu0 0.0
    %1462 = vmatpush1.xpose.msra.mxu0 0.0
    %1463 = vmatprep.subr.mxu0 0.0
    %1464 = vmatpush1.xpose.msra.mxu0 0.0
    %1465 = vmatprep.subr.mxu0 0.0
    %1466 = vmatpush1.xpose.msra.mxu0 0.0
    %1467 = vmatprep.subr.mxu0 0.0
    %1468 = vmatpush1.xpose.msra.mxu0 0.0
    %1469 = vmatprep.subr.mxu0 0.0
    %1470 = vmatpush1.xpose.msra.mxu0 0.0
    %1471 = vmatprep.subr.mxu0 0.0
    %1472 = vmatpush1.xpose.msra.mxu0 0.0
    %1473 = vmatprep.subr.mxu0 0.0
    %1474 = vmatpush1.xpose.msra.mxu0 0.0
    %1475 = vmatprep.subr.mxu0 0.0
    %1476 = vmatpush1.xpose.msra.mxu0 0.0
    %1477 = vmatprep.subr.mxu0 0.0
    %1478 = vmatpush1.xpose.msra.mxu0 0.0
    %1479 = vmatprep.subr.mxu0 0.0
    %1480 = vmatpush1.xpose.msra.mxu0 0.0
    %1481 = vmatprep.subr.mxu0 0.0
    %1482 = vmatpush1.xpose.msra.mxu0 0.0
    %1483 = vmatprep.subr.mxu0 0.0
    %1484 = vmatpush1.xpose.msra.mxu0 0.0
    %1485 = vmatprep.subr.mxu0 0.0
    %1486 = vmatpush1.xpose.msra.mxu0 0.0
    %1487 = vmatprep.subr.mxu0 0.0
    %1488 = vmatpush1.xpose.msra.mxu0 0.0
    %1489 = vmatprep.subr.mxu0 0.0
    %1490 = vmatpush1.xpose.msra.mxu0 0.0
    %1491 = vmatprep.subr.mxu0 0.0
    %1492 = vmatpush1.xpose.msra.mxu0 0.0
    %1493 = vmatprep.subr.mxu0 0.0
    %1494 = vmatpush1.xpose.msra.mxu0 0.0
    %1495 = vmatprep.subr.mxu0 0.0
    %1496 = vmatpush1.xpose.msra.mxu0 0.0
    %1497 = vmatprep.subr.mxu0 0.0
    %1498 = vmatpush1.xpose.msra.mxu0 0.0
    %1499 = vmatprep.subr.mxu0 0.0
    %1500 = vmatpush1.xpose.msra.mxu0 0.0
    %1501 = vmatprep.subr.mxu0 0.0
    %1502 = vmatpush1.xpose.msra.mxu0 0.0
    %1503 = vmatprep.subr.mxu0 0.0
    %1504 = vmatpush1.xpose.msra.mxu0 0.0
    %1505 = vmatprep.subr.mxu0 0.0
    %1506 = vmatpush1.xpose.msra.mxu0 0.0
    %1507 = vmatprep.subr.mxu0 0.0
    %1508 = vmatpush1.xpose.msra.mxu0 0.0
    %1509 = vmatprep.subr.mxu0 0.0
    %1510 = vmatpush1.xpose.msra.mxu0 0.0
    %1511 = vmatprep.subr.mxu0 0.0
    %1512 = vmatpush1.xpose.msra.mxu0 0.0
    %1513 = vmatprep.subr.mxu0 0.0
    %1514 = vmatpush1.xpose.msra.mxu0 0.0
    %1515 = vmatprep.subr.mxu0 0.0
    %1516 = vmatpush1.xpose.msra.mxu0 0.0
    %1517 = vmatprep.subr.mxu0 0.0
    %1518 = vmatpush1.xpose.msra.mxu0 0.0
    %1519 = vmatprep.subr.mxu0 0.0
    %1520 = vmatpush1.xpose.msra.mxu0 0.0
    %1521 = vmatprep.subr.mxu0 0.0
    %1522 = vmatpush1.xpose.msra.mxu0 0.0
    %1523 = vmatprep.mubr.f32.mxu0 0.0
    %1524 = vmatmul.mubr.f32.gmra.mrb[0].mxu0 %v1455
    %v1525 = vpop.f32.mrb[0].mxu0
    %v1526 = vadd.f32 %v32, %v1525
    %v1527 = vpop.f32.mrb[0].mxu0
    %1528 = vdwg.mxu0
    %v1529 = vsel %vm138, %v1448, -inf
    %1530 = vmax.xlane.f32.xlu0 %v1529
    %v1531 = vpop.xlane.xlu0 %1530
    %v1532 = vsel %vm138, %v1526, -inf
    %1533 = vmax.xlane.f32.xlu0 %v1532
    %v1534 = vpop.xlane.xlu0 %1533
    %v1535 = vsub.f32 %v1448, %v1531
    %v1536 = vsub.f32 %v1526, %v1534
    %v1537 = vmul.f32 %v1535, 1.442695
    %v1538 = vpow.pop %v1537
    %v1539 = vmul.f32 %v1536, 1.442695
    %v1540 = vpow.pop %v1539
    %v1541 = vsel %vm138, %v1538, 0.0
    %1542 = vadd.xlane.f32.xlu0 %v1541
    %v1543 = vpop.xlane.xlu0 %1542
    %v1544 = vsel %vm138, %v1540, 0.0
    %1545 = vadd.xlane.f32.xlu0 %v1544
    %v1546 = vpop.xlane.xlu0 %1545
    %v1547 = vrcp.pop %v1543
    %v1548 = vmul.f32 %v1538, %v1547
    %v1549 = vrcp.pop %v1546
    %v1550 = vmul.f32 %v1540, %v1549
    %1551 = vrot.lane.b32.xlu0 %v116, 40
    %v1552 = vpop.permute.xlu0 %1551
    %v1555 = vsel %vm138, %v1548, 0
    %1557 = vmatprep.subr.mxu0 0.0
    %1558 = vmatpush1.msra.mxu0 %v1552
    %1559 = vmatprep.subr.mxu0 0.0
    %1560 = vmatpush1.msra.mxu0 0.0
    %1561 = vmatprep.subr.mxu0 0.0
    %1562 = vmatpush1.msra.mxu0 0.0
    %1563 = vmatprep.subr.mxu0 0.0
    %1564 = vmatpush1.msra.mxu0 0.0
    %1565 = vmatprep.subr.mxu0 0.0
    %1566 = vmatpush1.msra.mxu0 0.0
    %1567 = vmatprep.subr.mxu0 0.0
    %1568 = vmatpush1.msra.mxu0 0.0
    %1569 = vmatprep.subr.mxu0 0.0
    %1570 = vmatpush1.msra.mxu0 0.0
    %1571 = vmatprep.subr.mxu0 0.0
    %1572 = vmatpush1.msra.mxu0 0.0
    %1573 = vmatprep.subr.mxu0 0.0
    %1574 = vmatpush1.msra.mxu0 0.0
    %1575 = vmatprep.subr.mxu0 0.0
    %1576 = vmatpush1.msra.mxu0 0.0
    %1577 = vmatprep.subr.mxu0 0.0
    %1578 = vmatpush1.msra.mxu0 0.0
    %1579 = vmatprep.subr.mxu0 0.0
    %1580 = vmatpush1.msra.mxu0 0.0
    %1581 = vmatprep.subr.mxu0 0.0
    %1582 = vmatpush1.msra.mxu0 0.0
    %1583 = vmatprep.subr.mxu0 0.0
    %1584 = vmatpush1.msra.mxu0 0.0
    %1585 = vmatprep.subr.mxu0 0.0
    %1586 = vmatpush1.msra.mxu0 0.0
    %1587 = vmatprep.subr.mxu0 0.0
    %1588 = vmatpush1.msra.mxu0 0.0
    %1589 = vmatprep.subr.mxu0 0.0
    %1590 = vmatpush1.msra.mxu0 0.0
    %1591 = vmatprep.subr.mxu0 0.0
    %1592 = vmatpush1.msra.mxu0 0.0
    %1593 = vmatprep.subr.mxu0 0.0
    %1594 = vmatpush1.msra.mxu0 0.0
    %1595 = vmatprep.subr.mxu0 0.0
    %1596 = vmatpush1.msra.mxu0 0.0
    %1597 = vmatprep.subr.mxu0 0.0
    %1598 = vmatpush1.msra.mxu0 0.0
    %1599 = vmatprep.subr.mxu0 0.0
    %1600 = vmatpush1.msra.mxu0 0.0
    %1601 = vmatprep.subr.mxu0 0.0
    %1602 = vmatpush1.msra.mxu0 0.0
    %1603 = vmatprep.subr.mxu0 0.0
    %1604 = vmatpush1.msra.mxu0 0.0
    %1605 = vmatprep.subr.mxu0 0.0
    %1606 = vmatpush1.msra.mxu0 0.0
    %1607 = vmatprep.subr.mxu0 0.0
    %1608 = vmatpush1.msra.mxu0 0.0
    %1609 = vmatprep.subr.mxu0 0.0
    %1610 = vmatpush1.msra.mxu0 0.0
    %1611 = vmatprep.subr.mxu0 0.0
    %1612 = vmatpush1.msra.mxu0 0.0
    %1613 = vmatprep.subr.mxu0 0.0
    %1614 = vmatpush1.msra.mxu0 0.0
    %1615 = vmatprep.subr.mxu0 0.0
    %1616 = vmatpush1.msra.mxu0 0.0
    %1617 = vmatprep.subr.mxu0 0.0
    %1618 = vmatpush1.msra.mxu0 0.0
    %1619 = vmatprep.subr.mxu0 0.0
    %1620 = vmatpush1.msra.mxu0 0.0
    %1621 = vmatprep.mubr.f32.mxu0 0.0
    %1622 = vmatmul.mubr.f32.gmra.mrb[0].mxu0 %v1555
    %v1623 = vpop.f32.mrb[0].mxu0
    %v1624 = vadd.f32 0.0, %v1623
    %v1625 = vpop.f32.mrb[0].mxu0
    %1626 = vdwg.mxu0
    %1627 = vrot.lane.b32.xlu0 %v121, 40
    %v1628 = vpop.permute.xlu0 %1627
    %v1631 = vsel %vm138, %v1550, 0
    %1633 = vmatprep.subr.mxu0 0.0
    %1634 = vmatpush1.msra.mxu0 %v1628
    %1635 = vmatprep.subr.mxu0 0.0
    %1636 = vmatpush1.msra.mxu0 0.0
    %1637 = vmatprep.subr.mxu0 0.0
    %1638 = vmatpush1.msra.mxu0 0.0
    %1639 = vmatprep.subr.mxu0 0.0
    %1640 = vmatpush1.msra.mxu0 0.0
    %1641 = vmatprep.subr.mxu0 0.0
    %1642 = vmatpush1.msra.mxu0 0.0
    %1643 = vmatprep.subr.mxu0 0.0
    %1644 = vmatpush1.msra.mxu0 0.0
    %1645 = vmatprep.subr.mxu0 0.0
    %1646 = vmatpush1.msra.mxu0 0.0
    %1647 = vmatprep.subr.mxu0 0.0
    %1648 = vmatpush1.msra.mxu0 0.0
    %1649 = vmatprep.subr.mxu0 0.0
    %1650 = vmatpush1.msra.mxu0 0.0
    %1651 = vmatprep.subr.mxu0 0.0
    %1652 = vmatpush1.msra.mxu0 0.0
    %1653 = vmatprep.subr.mxu0 0.0
    %1654 = vmatpush1.msra.mxu0 0.0
    %1655 = vmatprep.subr.mxu0 0.0
    %1656 = vmatpush1.msra.mxu0 0.0
    %1657 = vmatprep.subr.mxu0 0.0
    %1658 = vmatpush1.msra.mxu0 0.0
    %1659 = vmatprep.subr.mxu0 0.0
    %1660 = vmatpush1.msra.mxu0 0.0
    %1661 = vmatprep.subr.mxu0 0.0
    %1662 = vmatpush1.msra.mxu0 0.0
    %1663 = vmatprep.subr.mxu0 0.0
    %1664 = vmatpush1.msra.mxu0 0.0
    %1665 = vmatprep.subr.mxu0 0.0
    %1666 = vmatpush1.msra.mxu0 0.0
    %1667 = vmatprep.subr.mxu0 0.0
    %1668 = vmatpush1.msra.mxu0 0.0
    %1669 = vmatprep.subr.mxu0 0.0
    %1670 = vmatpush1.msra.mxu0 0.0
    %1671 = vmatprep.subr.mxu0 0.0
    %1672 = vmatpush1.msra.mxu0 0.0
    %1673 = vmatprep.subr.mxu0 0.0
    %1674 = vmatpush1.msra.mxu0 0.0
    %1675 = vmatprep.subr.mxu0 0.0
    %1676 = vmatpush1.msra.mxu0 0.0
    %1677 = vmatprep.subr.mxu0 0.0
    %1678 = vmatpush1.msra.mxu0 0.0
    %1679 = vmatprep.subr.mxu0 0.0
    %1680 = vmatpush1.msra.mxu0 0.0
    %1681 = vmatprep.subr.mxu0 0.0
    %1682 = vmatpush1.msra.mxu0 0.0
    %1683 = vmatprep.subr.mxu0 0.0
    %1684 = vmatpush1.msra.mxu0 0.0
    %1685 = vmatprep.subr.mxu0 0.0
    %1686 = vmatpush1.msra.mxu0 0.0
    %1687 = vmatprep.subr.mxu0 0.0
    %1688 = vmatpush1.msra.mxu0 0.0
    %1689 = vmatprep.subr.mxu0 0.0
    %1690 = vmatpush1.msra.mxu0 0.0
    %1691 = vmatprep.subr.mxu0 0.0
    %1692 = vmatpush1.msra.mxu0 0.0
    %1693 = vmatprep.subr.mxu0 0.0
    %1694 = vmatpush1.msra.mxu0 0.0
    %1695 = vmatprep.subr.mxu0 0.0
    %1696 = vmatpush1.msra.mxu0 0.0
    %1697 = vmatprep.mubr.f32.mxu0 0.0
    %1698 = vmatmul.mubr.f32.gmra.mrb[0].mxu0 %v1631
    %v1699 = vpop.f32.mrb[0].mxu0
    %v1700 = vadd.f32 0.0, %v1699
    %v1701 = vpop.f32.mrb[0].mxu0
    %1702 = vdwg.mxu0
    %v1704 = vsel %vm138, %v1624, 0
    %v1707 = vsel %vm138, %v1700, 0
    %1709 = vmatprep.subr.mxu0 0.0
    %1710 = vmatpush1.msra.mxu0 %v127
    %1711 = vmatprep.subr.mxu0 0.0
    %1712 = vmatpush1.msra.mxu0 0.0
    %1713 = vmatprep.subr.mxu0 0.0
    %1714 = vmatpush1.msra.mxu0 0.0
    %1715 = vmatprep.subr.mxu0 0.0
    %1716 = vmatpush1.msra.mxu0 0.0
    %1717 = vmatprep.subr.mxu0 0.0
    %1718 = vmatpush1.msra.mxu0 0.0
    %1719 = vmatprep.subr.mxu0 0.0
    %1720 = vmatpush1.msra.mxu0 0.0
    %1721 = vmatprep.subr.mxu0 0.0
    %1722 = vmatpush1.msra.mxu0 0.0
    %1723 = vmatprep.subr.mxu0 0.0
    %1724 = vmatpush1.msra.mxu0 0.0
    %1725 = vmatprep.subr.mxu0 0.0
    %1726 = vmatpush1.msra.mxu0 0.0
    %1727 = vmatprep.subr.mxu0 0.0
    %1728 = vmatpush1.msra.mxu0 0.0
    %1729 = vmatprep.subr.mxu0 0.0
    %1730 = vmatpush1.msra.mxu0 0.0
    %1731 = vmatprep.subr.mxu0 0.0
    %1732 = vmatpush1.msra.mxu0 0.0
    %1733 = vmatprep.subr.mxu0 0.0
    %1734 = vmatpush1.msra.mxu0 0.0
    %1735 = vmatprep.subr.mxu0 0.0
    %1736 = vmatpush1.msra.mxu0 0.0
    %1737 = vmatprep.subr.mxu0 0.0
    %1738 = vmatpush1.msra.mxu0 0.0
    %1739 = vmatprep.subr.mxu0 0.0
    %1740 = vmatpush1.msra.mxu0 0.0
    %1741 = vmatprep.subr.mxu0 0.0
    %1742 = vmatpush1.msra.mxu0 0.0
    %1743 = vmatprep.subr.mxu0 0.0
    %1744 = vmatpush1.msra.mxu0 0.0
    %1745 = vmatprep.subr.mxu0 0.0
    %1746 = vmatpush1.msra.mxu0 0.0
    %1747 = vmatprep.subr.mxu0 0.0
    %1748 = vmatpush1.msra.mxu0 0.0
    %1749 = vmatprep.subr.mxu0 0.0
    %1750 = vmatpush1.msra.mxu0 0.0
    %1751 = vmatprep.subr.mxu0 0.0
    %1752 = vmatpush1.msra.mxu0 0.0
    %1753 = vmatprep.subr.mxu0 0.0
    %1754 = vmatpush1.msra.mxu0 0.0
    %1755 = vmatprep.subr.mxu0 0.0
    %1756 = vmatpush1.msra.mxu0 0.0
    %1757 = vmatprep.subr.mxu0 0.0
    %1758 = vmatpush1.msra.mxu0 0.0
    %1759 = vmatprep.subr.mxu0 0.0
    %1760 = vmatpush1.msra.mxu0 0.0
    %1761 = vmatprep.subr.mxu0 0.0
    %1762 = vmatpush1.msra.mxu0 0.0
    %1763 = vmatprep.subr.mxu0 0.0
    %1764 = vmatpush1.msra.mxu0 0.0
    %1765 = vmatprep.subr.mxu0 0.0
    %1766 = vmatpush1.msra.mxu0 0.0
    %1767 = vmatprep.subr.mxu0 0.0
    %1768 = vmatpush1.msra.mxu0 0.0
    %1769 = vmatprep.subr.mxu0 0.0
    %1770 = vmatpush1.msra.mxu0 0.0
    %1771 = vmatprep.subr.mxu0 0.0
    %1772 = vmatpush1.msra.mxu0 0.0
    %1773 = vmatprep.mubr.f32.mxu0 0.0
    %1774 = vmatmul.mubr.f32.gmra.mrb[0].mxu0 %v1704
    %v1775 = vpop.f32.mrb[0].mxu0
    %v1776 = vadd.f32 0.0, %v1775
    %v1777 = vpop.f32.mrb[0].mxu0
    %1778 = vmatprep.mubr.f32.mxu0 0.0
    %1779 = vmatmul.mubr.f32.gmra.mrb[0].mxu0 %v1707
    %v1780 = vpop.f32.mrb[0].mxu0
    %v1781 = vadd.f32 0.0, %v1780
    %v1782 = vpop.f32.mrb[0].mxu0
    %1783 = vdwg.mxu0
    %v1784 = vadd.f32 %v1371, %v1776
    %v1785 = vadd.f32 %v1372, %v1781
    %1786 = vrot.lane.b32.xlu0 %v722, 8
    %v1787 = vpop.permute.xlu0 %1786
    %1788 = vrot.lane.b32.xlu0 %v724, 8
    %v1789 = vpop.permute.xlu0 %1788
    %1792 = vrot.lane.b32.xlu0 %v1135, 16
    %v1793 = vpop.permute.xlu0 %1792
    %1794 = vrot.lane.b32.xlu0 %v1137, 16
    %v1795 = vpop.permute.xlu0 %1794
    %1798 = vrot.lane.b32.xlu0 %v1548, 24
    %v1799 = vpop.permute.xlu0 %1798
    %1800 = vrot.lane.b32.xlu0 %v1550, 24
    %v1801 = vpop.permute.xlu0 %1800
    %v1804 = vsel %vm138, %v309, %v1787
    %v1805 = vsel %vm138, %v311, %v1789
    %vm1806 = vcmask 130048
    %v1807 = vsel %vm1806, %v1804, %v1793
    %v1808 = vsel %vm1806, %v1805, %v1795
    %vm1809 = vcmask 195584
    %v1810 = vsel %vm1809, %v1807, %v1799
    %v1811 = vsel %vm1809, %v1808, %v1801
    %1812 = vst.msk [vmem:[%s8] sm:$0xff] %vm42, %v1810
    %1813 = vst.msk [vmem:[%s8 + $0x8] sm:$0xff] %vm42, %v1811
    %v1814 = vld [vmem:[%s6 + $0x4] sm:$0x1]
    %v1815 = vld [vmem:[%s6 + $0x5] sm:$0x1]
    %v1816 = vsel %vm42, %v1784, 0.0
    %1817 = vadd.xlane.f32.xlu0 %v1816
    %v1818 = vpop.xlane.xlu0 %1817
    %v1819 = vsel %vm42, %v1785, 0.0
    %1820 = vadd.xlane.f32.xlu0 %v1819
    %v1821 = vpop.xlane.xlu0 %1820
    %v1822 = vrcp.pop 32.0
    %v1823 = vmul.f32 %v1818, %v1822
    %v1824 = vmul.f32 %v1821, %v1822
    %v1825 = vsub.f32 %v1784, %v1823
    %v1826 = vsub.f32 %v1785, %v1824
    %v1827 = vmul.f32 %v1825, %v1825
    %v1828 = vmul.f32 %v1826, %v1826
    %v1829 = vsel %vm42, %v1827, 0.0
    %1830 = vadd.xlane.f32.xlu0 %v1829
    %v1831 = vpop.xlane.xlu0 %1830
    %v1832 = vsel %vm42, %v1828, 0.0
    %1833 = vadd.xlane.f32.xlu0 %v1832
    %v1834 = vpop.xlane.xlu0 %1833
    %v1835 = vmul.f32 %v1831, %v1822
    %v1836 = vmul.f32 %v1834, %v1822
    %v1837 = vadd.f32 %v1835, 1e-05
    %v1838 = vadd.f32 %v1836, 1e-05
    %v1839 = vrsqrt.pop %v1837
    %v1840 = vrsqrt.pop %v1838
    %v1841 = vmul.f32 %v1825, %v1839
    %v1842 = vmul.f32 %v1826, %v1840
    %v1843 = vlaneseq
    %v1844 = vshrl.u32 %v1843, 7
    %v1845 = vsub.s32 0, %v1844
    %v1846 = vrot.slane %v1814, %v1845
    %v1847 = vmul.f32 %v1841, %v1846
    %v1848 = vmul.f32 %v1842, %v1846
    %v1849 = vlaneseq
    %v1850 = vshrl.u32 %v1849, 7
    %v1851 = vsub.s32 0, %v1850
    %v1852 = vrot.slane %v1815, %v1851
    %v1853 = vadd.f32 %v1847, %v1852
    %v1854 = vadd.f32 %v1848, %v1852
    %v1855 = vld [vmem:[%s4] sm:$0xff]
    %v1856 = vld [vmem:[%s4 + $0x8] sm:$0xff]
    %v1857 = vld [vmem:[%s4 + $0x10] sm:$0xff]
    %v1858 = vld [vmem:[%s4 + $0x18] sm:$0xff]
    %v1859 = vld [vmem:[%s6 + $0x2] sm:$0x1]
    %v1860 = vlaneseq
    %v1861 = vshrl.u32 %v1860, 7
    %v1862 = vsub.s32 0, %v1861
    %v1863 = vrot.slane %v1859, %v1862
    %v1865 = vsel %vm42, %v1853, 0
    %v1868 = vsel %vm42, %v1854, 0
    %1870 = vmatprep.subr.mxu0 0.0
    %1871 = vmatpush1.msra.mxu0 %v1855
    %1872 = vmatprep.subr.mxu0 0.0
    %1873 = vmatpush1.msra.mxu0 %v1856
    %1874 = vmatprep.subr.mxu0 0.0
    %1875 = vmatpush1.msra.mxu0 %v1857
    %1876 = vmatprep.subr.mxu0 0.0
    %1877 = vmatpush1.msra.mxu0 %v1858
    %1878 = vmatprep.subr.mxu0 0.0
    %1879 = vmatpush1.msra.mxu0 0.0
    %1880 = vmatprep.subr.mxu0 0.0
    %1881 = vmatpush1.msra.mxu0 0.0
    %1882 = vmatprep.subr.mxu0 0.0
    %1883 = vmatpush1.msra.mxu0 0.0
    %1884 = vmatprep.subr.mxu0 0.0
    %1885 = vmatpush1.msra.mxu0 0.0
    %1886 = vmatprep.subr.mxu0 0.0
    %1887 = vmatpush1.msra.mxu0 0.0
    %1888 = vmatprep.subr.mxu0 0.0
    %1889 = vmatpush1.msra.mxu0 0.0
    %1890 = vmatprep.subr.mxu0 0.0
    %1891 = vmatpush1.msra.mxu0 0.0
    %1892 = vmatprep.subr.mxu0 0.0
    %1893 = vmatpush1.msra.mxu0 0.0
    %1894 = vmatprep.subr.mxu0 0.0
    %1895 = vmatpush1.msra.mxu0 0.0
    %1896 = vmatprep.subr.mxu0 0.0
    %1897 = vmatpush1.msra.mxu0 0.0
    %1898 = vmatprep.subr.mxu0 0.0
    %1899 = vmatpush1.msra.mxu0 0.0
    %1900 = vmatprep.subr.mxu0 0.0
    %1901 = vmatpush1.msra.mxu0 0.0
    %1902 = vmatprep.subr.mxu0 0.0
    %1903 = vmatpush1.msra.mxu0 0.0
    %1904 = vmatprep.subr.mxu0 0.0
    %1905 = vmatpush1.msra.mxu0 0.0
    %1906 = vmatprep.subr.mxu0 0.0
    %1907 = vmatpush1.msra.mxu0 0.0
    %1908 = vmatprep.subr.mxu0 0.0
    %1909 = vmatpush1.msra.mxu0 0.0
    %1910 = vmatprep.subr.mxu0 0.0
    %1911 = vmatpush1.msra.mxu0 0.0
    %1912 = vmatprep.subr.mxu0 0.0
    %1913 = vmatpush1.msra.mxu0 0.0
    %1914 = vmatprep.subr.mxu0 0.0
    %1915 = vmatpush1.msra.mxu0 0.0
    %1916 = vmatprep.subr.mxu0 0.0
    %1917 = vmatpush1.msra.mxu0 0.0
    %1918 = vmatprep.subr.mxu0 0.0
    %1919 = vmatpush1.msra.mxu0 0.0
    %1920 = vmatprep.subr.mxu0 0.0
    %1921 = vmatpush1.msra.mxu0 0.0
    %1922 = vmatprep.subr.mxu0 0.0
    %1923 = vmatpush1.msra.mxu0 0.0
    %1924 = vmatprep.subr.mxu0 0.0
    %1925 = vmatpush1.msra.mxu0 0.0
    %1926 = vmatprep.subr.mxu0 0.0
    %1927 = vmatpush1.msra.mxu0 0.0
    %1928 = vmatprep.subr.mxu0 0.0
    %1929 = vmatpush1.msra.mxu0 0.0
    %1930 = vmatprep.subr.mxu0 0.0
    %1931 = vmatpush1.msra.mxu0 0.0
    %1932 = vmatprep.subr.mxu0 0.0
    %1933 = vmatpush1.msra.mxu0 0.0
    %1934 = vmatprep.mubr.f32.mxu0 0.0
    %1935 = vmatmul.mubr.f32.gmra.mrb[0].mxu0 %v1865
    %v1936 = vpop.f32.mrb[0].mxu0
    %v1937 = vadd.f32 %v1863, %v1936
    %v1938 = vpop.f32.mrb[0].mxu0
    %1939 = vmatprep.mubr.f32.mxu0 0.0
    %1940 = vmatmul.mubr.f32.gmra.mrb[0].mxu0 %v1868
    %v1941 = vpop.f32.mrb[0].mxu0
    %v1942 = vadd.f32 %v1863, %v1941
    %v1943 = vpop.f32.mrb[0].mxu0
    %1944 = vdwg.mxu0
    %v1945 = vmax.f32 %v1937, 0.0
    %v1946 = vmax.f32 %v1942, 0.0
    %v1947 = vld [vmem:[%s5] sm:$0xff]
    %v1948 = vld [vmem:[%s5 + $0x8] sm:$0xff]
    %v1949 = vld [vmem:[%s5 + $0x10] sm:$0xff]
    %v1950 = vld [vmem:[%s5 + $0x18] sm:$0xff]
    %v1951 = vld [vmem:[%s5 + $0x20] sm:$0xff]
    %v1952 = vld [vmem:[%s5 + $0x28] sm:$0xff]
    %v1953 = vld [vmem:[%s5 + $0x30] sm:$0xff]
    %v1954 = vld [vmem:[%s5 + $0x38] sm:$0xff]
    %v1955 = vld [vmem:[%s6 + $0x3] sm:$0x1]
    %v1956 = vlaneseq
    %v1957 = vshrl.u32 %v1956, 7
    %v1958 = vsub.s32 0, %v1957
    %v1959 = vrot.slane %v1955, %v1958
    %vm1960 = vcmask 523264
    %v1962 = vsel %vm1960, %v1945, 0
    %v1965 = vsel %vm1960, %v1946, 0
    %1967 = vmatprep.subr.mxu0 0.0
    %1968 = vmatpush1.msra.mxu0 %v1947
    %1969 = vmatprep.subr.mxu0 0.0
    %1970 = vmatpush1.msra.mxu0 %v1948
    %1971 = vmatprep.subr.mxu0 0.0
    %1972 = vmatpush1.msra.mxu0 %v1949
    %1973 = vmatprep.subr.mxu0 0.0
    %1974 = vmatpush1.msra.mxu0 %v1950
    %1975 = vmatprep.subr.mxu0 0.0
    %1976 = vmatpush1.msra.mxu0 %v1951
    %1977 = vmatprep.subr.mxu0 0.0
    %1978 = vmatpush1.msra.mxu0 %v1952
    %1979 = vmatprep.subr.mxu0 0.0
    %1980 = vmatpush1.msra.mxu0 %v1953
    %1981 = vmatprep.subr.mxu0 0.0
    %1982 = vmatpush1.msra.mxu0 %v1954
    %1983 = vmatprep.subr.mxu0 0.0
    %1984 = vmatpush1.msra.mxu0 0.0
    %1985 = vmatprep.subr.mxu0 0.0
    %1986 = vmatpush1.msra.mxu0 0.0
    %1987 = vmatprep.subr.mxu0 0.0
    %1988 = vmatpush1.msra.mxu0 0.0
    %1989 = vmatprep.subr.mxu0 0.0
    %1990 = vmatpush1.msra.mxu0 0.0
    %1991 = vmatprep.subr.mxu0 0.0
    %1992 = vmatpush1.msra.mxu0 0.0
    %1993 = vmatprep.subr.mxu0 0.0
    %1994 = vmatpush1.msra.mxu0 0.0
    %1995 = vmatprep.subr.mxu0 0.0
    %1996 = vmatpush1.msra.mxu0 0.0
    %1997 = vmatprep.subr.mxu0 0.0
    %1998 = vmatpush1.msra.mxu0 0.0
    %1999 = vmatprep.subr.mxu0 0.0
    %2000 = vmatpush1.msra.mxu0 0.0
    %2001 = vmatprep.subr.mxu0 0.0
    %2002 = vmatpush1.msra.mxu0 0.0
    %2003 = vmatprep.subr.mxu0 0.0
    %2004 = vmatpush1.msra.mxu0 0.0
    %2005 = vmatprep.subr.mxu0 0.0
    %2006 = vmatpush1.msra.mxu0 0.0
    %2007 = vmatprep.subr.mxu0 0.0
    %2008 = vmatpush1.msra.mxu0 0.0
    %2009 = vmatprep.subr.mxu0 0.0
    %2010 = vmatpush1.msra.mxu0 0.0
    %2011 = vmatprep.subr.mxu0 0.0
    %2012 = vmatpush1.msra.mxu0 0.0
    %2013 = vmatprep.subr.mxu0 0.0
    %2014 = vmatpush1.msra.mxu0 0.0
    %2015 = vmatprep.subr.mxu0 0.0
    %2016 = vmatpush1.msra.mxu0 0.0
    %2017 = vmatprep.subr.mxu0 0.0
    %2018 = vmatpush1.msra.mxu0 0.0
    %2019 = vmatprep.subr.mxu0 0.0
    %2020 = vmatpush1.msra.mxu0 0.0
    %2021 = vmatprep.subr.mxu0 0.0
    %2022 = vmatpush1.msra.mxu0 0.0
    %2023 = vmatprep.subr.mxu0 0.0
    %2024 = vmatpush1.msra.mxu0 0.0
    %2025 = vmatprep.subr.mxu0 0.0
    %2026 = vmatpush1.msra.mxu0 0.0
    %2027 = vmatprep.subr.mxu0 0.0
    %2028 = vmatpush1.msra.mxu0 0.0
    %2029 = vmatprep.subr.mxu0 0.0
    %2030 = vmatpush1.msra.mxu0 0.0
    %2031 = vmatprep.mubr.f32.mxu0 0.0
    %2032 = vmatmul.mubr.f32.gmra.mrb[0].mxu0 %v1962
    %v2033 = vpop.f32.mrb[0].mxu0
    %v2034 = vadd.f32 %v1959, %v2033
    %v2035 = vpop.f32.mrb[0].mxu0
    %2036 = vmatprep.mubr.f32.mxu0 0.0
    %2037 = vmatmul.mubr.f32.gmra.mrb[0].mxu0 %v1965
    %v2038 = vpop.f32.mrb[0].mxu0
    %v2039 = vadd.f32 %v1959, %v2038
    %v2040 = vpop.f32.mrb[0].mxu0
    %2041 = vdwg.mxu0
    %v2042 = vadd.f32 %v2034, %v1853
    %v2043 = vadd.f32 %v2039, %v1854
    %v2044 = vld [vmem:[%s6 + $0x6] sm:$0x1]
    %v2045 = vld [vmem:[%s6 + $0x7] sm:$0x1]
    %v2046 = vsel %vm42, %v2042, 0.0
    %2047 = vadd.xlane.f32.xlu0 %v2046
    %v2048 = vpop.xlane.xlu0 %2047
    %v2049 = vsel %vm42, %v2043, 0.0
    %2050 = vadd.xlane.f32.xlu0 %v2049
    %v2051 = vpop.xlane.xlu0 %2050
    %v2052 = vmul.f32 %v2048, %v1822
    %v2053 = vmul.f32 %v2051, %v1822
    %v2054 = vsub.f32 %v2042, %v2052
    %v2055 = vsub.f32 %v2043, %v2053
    %v2056 = vmul.f32 %v2054, %v2054
    %v2057 = vmul.f32 %v2055, %v2055
    %v2058 = vsel %vm42, %v2056, 0.0
    %2059 = vadd.xlane.f32.xlu0 %v2058
    %v2060 = vpop.xlane.xlu0 %2059
    %v2061 = vsel %vm42, %v2057, 0.0
    %2062 = vadd.xlane.f32.xlu0 %v2061
    %v2063 = vpop.xlane.xlu0 %2062
    %v2064 = vmul.f32 %v2060, %v1822
    %v2065 = vmul.f32 %v2063, %v1822
    %v2066 = vadd.f32 %v2064, 1e-05
    %v2067 = vadd.f32 %v2065, 1e-05
    %v2068 = vrsqrt.pop %v2066
    %v2069 = vrsqrt.pop %v2067
    %v2070 = vmul.f32 %v2054, %v2068
    %v2071 = vmul.f32 %v2055, %v2069
    %v2072 = vlaneseq
    %v2073 = vshrl.u32 %v2072, 7
    %v2074 = vsub.s32 0, %v2073
    %v2075 = vrot.slane %v2044, %v2074
    %v2076 = vmul.f32 %v2070, %v2075
    %v2077 = vmul.f32 %v2071, %v2075
    %v2078 = vlaneseq
    %v2079 = vshrl.u32 %v2078, 7
    %v2080 = vsub.s32 0, %v2079
    %v2081 = vrot.slane %v2045, %v2080
    %v2082 = vadd.f32 %v2076, %v2081
    %v2083 = vadd.f32 %v2077, %v2081
    %2084 = vst.msk [vmem:[#allocation2] sm:$0xff] %vm42, %v2082
    %2085 = vst.msk [vmem:[#allocation2 + $0x8] sm:$0xff] %vm42, %v2083
    // Predicated region
    $region30: #{_self_attn_forward.1} parent=1 // pred_check
      _
    $region31: #{_self_attn_forward.1} parent=1 // pred_check_branch
      %2087 = sbr.rel (0) target = $region33
    $region32: #{_self_attn_forward.1} parent=1 // pred_region
      %s2089 = ssub.s32 256, 256
      %2090 = vsyncadd [#allocation3], %s2089
      %s2091 = sshll.u32 [#allocation2], 4
      %s2092 = int_to_ptr.vmem [resolvable:$true] %s2091
      %2097 = dma.vmem_to_hbm [thread:$0]  %s2092, 256, %s7, [#allocation3], 128, 128, 8
    $region33: #{_self_attn_forward.1} parent=1 // pred_fallthru
      _
    // Predicated region
    $region34: #{_self_attn_forward.1} parent=1 // pred_check
      _
    $region35: #{_self_attn_forward.1} parent=1 // pred_check_branch
      %2099 = sbr.rel (0) target = $region37
    $region36: #{_self_attn_forward.1} parent=1 // pred_region
      _
    $region37: #{_self_attn_forward.1} parent=1 // pred_fallthru
      _
    // Predicated region
    $region38: #{_self_attn_forward.1} parent=1 // pred_check
      _
    $region39: #{_self_attn_forward.1} parent=1 // pred_check_branch
      %2101 = sbr.rel (0) target = $region41
    $region40: #{_self_attn_forward.1} parent=1 // pred_region
      %2102 = dma.done [#allocation3], 256
    $region41: #{_self_attn_forward.1} parent=1 // pred_fallthru
      _
    // Predicated region
    $region42: #{_self_attn_forward.1} parent=1 // pred_check
      _
    $region43: #{_self_attn_forward.1} parent=1 // pred_check_branch
      %2104 = sbr.rel (0) target = $region45
    $region44: #{_self_attn_forward.1} parent=1 // pred_region
      _
    $region45: #{_self_attn_forward.1} parent=1 // pred_fallthru
      _
    %2105 = vsyncpa [#allocation3], 1

</llo_original>
